<compile_context>
chip_gen: v6e
topology: v6e:2x2x1
jax: 0.10.0
libtpu: 0.0.40
codegen_flags: <defaults>
</compile_context>

<pallas_src>
import jax
import jax.numpy as jnp
from jax.experimental import pallas as pl
from jax.experimental.pallas import tpu as pltpu


def lstm_kernel(x_ref, m_ref, we_ref, be_ref, wih_ref, whh_ref, bg_ref,
                wfc_ref, bfc_ref, out_ref, gx_ref):
    Bp = out_ref.shape[0]            # padded batch (multiple of 8)
    TBp = x_ref.shape[0]             # T * Bp
    T = TBp // Bp
    Hp = whh_ref.shape[0]            # padded hidden (multiple of 128)

    # ---- prologue: batched input path over all timesteps (MXU) ----
    emb = jnp.dot(x_ref[...], we_ref[...],
                  preferred_element_type=jnp.float32) + be_ref[...]
    emb = jnp.maximum(emb, 0.0)                                   # (T*Bp, V)
    gx_ref[...] = (jnp.dot(emb, wih_ref[...],
                           preferred_element_type=jnp.float32)
                   + bg_ref[...])                                 # (T*Bp, 4Hp)

    h = jnp.zeros((Bp, Hp), jnp.float32)
    c = jnp.zeros((Bp, Hp), jnp.float32)
    acc = jnp.zeros((Bp, Hp), jnp.float32)

    # ---- serial recurrence, fully unrolled (T is small & static) ----
    # Only the (Bp, Hp) @ (Hp, 4Hp) matmul is on the dependent path.
    for t in range(T):
        g_all = gx_ref[t * Bp:(t + 1) * Bp, :] + jnp.dot(
            h, whh_ref[...], preferred_element_type=jnp.float32)  # (Bp, 4Hp)
        # Gate blocks sit on 128-lane boundaries -> whole-vreg slices.
        # PyTorch gate order: i, f, g, o.
        i_g = jax.nn.sigmoid(g_all[:, 0 * Hp:1 * Hp])
        f_g = jax.nn.sigmoid(g_all[:, 1 * Hp:2 * Hp])
        g_g = jnp.tanh(g_all[:, 2 * Hp:3 * Hp])
        o_g = jax.nn.sigmoid(g_all[:, 3 * Hp:4 * Hp])
        c = f_g * c + i_g * g_g
        h = o_g * jnp.tanh(c)
        acc = acc + h * m_ref[t * Bp:(t + 1) * Bp, :]              # masked sum

    # ---- final fc (lane-dense padded output) ----
    # TODO(synk): dropout treated as identity (eval mode); training-mode
    # dropout masking/scaling is not implemented.
    logit = jnp.dot(acc, wfc_ref[...],
                    preferred_element_type=jnp.float32) + bfc_ref[...]
    out_ref[...] = logit.astype(out_ref.dtype)


def _round_up(n, m):
    return ((n + m - 1) // m) * m


def _pad_gate_cols(w, H, Hp):
    """(rows, 4H) -> (rows, 4Hp): gate g placed at columns [g*Hp, g*Hp+H)."""
    blocks = [jnp.pad(w[:, g * H:(g + 1) * H], ((0, 0), (0, Hp - H)))
              for g in range(4)]
    return jnp.concatenate(blocks, axis=1)


def lstm_forward(x, mask, params):
    T, B, C = x.shape
    H = params["w_hh"].shape[0]
    L = params["w_fc"].shape[1]

    Bp = _round_up(B, 8)        # sublane multiple
    Hp = _round_up(H, 128)      # lane multiple -> gate blocks vreg-aligned
    Lp = _round_up(L, 128)      # lane-dense output store

    # ---- zero-pad to TPU-friendly shapes (exact math, see kernel header) ----
    xp = jnp.pad(x, ((0, 0), (0, Bp - B), (0, 0))).reshape(T * Bp, C)
    mp = jnp.pad(mask.astype(jnp.float32),
                 ((0, 0), (0, Bp - B))).reshape(T * Bp, 1)

    w_ih_p = _pad_gate_cols(params["w_ih"], H, Hp)                   # (V, 4Hp)
    w_hh_p = jnp.pad(_pad_gate_cols(params["w_hh"], H, Hp),
                     ((0, Hp - H), (0, 0)))                          # (Hp, 4Hp)
    b_g_p = _pad_gate_cols(params["b_gates"], H, Hp)                 # (1, 4Hp)
    w_fc_p = jnp.pad(params["w_fc"], ((0, Hp - H), (0, Lp - L)))     # (Hp, Lp)
    b_fc_p = jnp.pad(params["b_fc"], ((0, 0), (0, Lp - L)))          # (1, Lp)

    out = pl.pallas_call(
        lstm_kernel,
        out_shape=jax.ShapeDtypeStruct((Bp, Lp), jnp.float32),
        scratch_shapes=[pltpu.VMEM((T * Bp, 4 * Hp), jnp.float32)],  # gates_x
    )(xp, mp,
      params["w_embed"], params["b_embed"],
      w_ih_p, w_hh_p, b_g_p, w_fc_p, b_fc_p)

    return out[:B, :L]


def reference(x, mask, params):
    """Pure-JAX reference matching PyTorch semantics (eval mode)."""
    emb = jnp.maximum(x @ params["w_embed"] + params["b_embed"], 0.0)
    T, B, V = emb.shape
    H = params["w_hh"].shape[0]

    def step(carry, inp):
        h, c = carry
        e, m = inp
        gates = e @ params["w_ih"] + h @ params["w_hh"] + params["b_gates"]
        i = jax.nn.sigmoid(gates[:, :H])
        f = jax.nn.sigmoid(gates[:, H:2 * H])
        g = jnp.tanh(gates[:, 2 * H:3 * H])
        o = jax.nn.sigmoid(gates[:, 3 * H:])
        c = f * c + i * g
        h = o * jnp.tanh(c)
        return (h, c), h * m[:, None]

    init = (jnp.zeros((B, H), jnp.float32), jnp.zeros((B, H), jnp.float32))
    _, outs = jax.lax.scan(step, init, (emb, mask))
    return outs.sum(0) @ params["w_fc"] + params["b_fc"]


def init_params(key, n_codes, visit_size, hidden_size, n_labels):
    ks = jax.random.split(key, 8)
    u = lambda k, shp, scale: jax.random.uniform(k, shp, jnp.float32,
                                                 -scale, scale)
    se = 1.0 / jnp.sqrt(n_codes)
    sh = 1.0 / jnp.sqrt(hidden_size)
    sf = 1.0 / jnp.sqrt(hidden_size)
    return {
        # stored pre-transposed: y = x @ W + b
        "w_embed": u(ks[0], (n_codes, visit_size), se),
        "b_embed": u(ks[1], (1, visit_size), se),
        "w_ih":    u(ks[2], (visit_size, 4 * hidden_size), sh),
        "w_hh":    u(ks[3], (hidden_size, 4 * hidden_size), sh),
        # b_ih + b_hh folded together
        "b_gates": u(ks[4], (1, 4 * hidden_size), sh)
                 + u(ks[5], (1, 4 * hidden_size), sh),
        "w_fc":    u(ks[6], (hidden_size, n_labels), sf),
        "b_fc":    u(ks[7], (1, n_labels), sf),
    }


if __name__ == "__main__":
    # options: n_diagnosis_codes=16, visit_size=32, hidden_size=32, n_labels=4
    T, B, C, V, H, L = 8, 4, 16, 32, 32, 4

    key = jax.random.PRNGKey(0)
    kx, km, kp = jax.random.split(key, 3)
    x = jax.random.normal(kx, (T, B, C), jnp.float32)
    mask = (jax.random.uniform(km, (T, B)) > 0.3).astype(jnp.float32)
    params = init_params(kp, C, V, H, L)

    fwd = jax.jit(lstm_forward)
    out = jax.block_until_ready(fwd(x, mask, params))

    ref = reference(x, mask, params)
    assert out.shape == (B, L)
    assert jnp.allclose(out, ref, atol=1e-4, rtol=1e-4), (
        f"max abs err {jnp.max(jnp.abs(out - ref))}")
    print("KERNEL_OK")
</pallas_src>

<mosaic_0001>
module attributes {stable_mosaic.version = 11 : i64} {
  func.func @lstm_kernel(%arg0: memref<64x16xf32, #tpu.memory_space<vmem>>, %arg1: memref<64x1xf32, #tpu.memory_space<vmem>>, %arg2: memref<16x32xf32, #tpu.memory_space<vmem>>, %arg3: memref<1x32xf32, #tpu.memory_space<vmem>>, %arg4: memref<32x512xf32, #tpu.memory_space<vmem>>, %arg5: memref<128x512xf32, #tpu.memory_space<vmem>>, %arg6: memref<1x512xf32, #tpu.memory_space<vmem>>, %arg7: memref<128x128xf32, #tpu.memory_space<vmem>>, %arg8: memref<1x128xf32, #tpu.memory_space<vmem>>, %arg9: memref<8x128xf32, #tpu.memory_space<vmem>>, %arg10: memref<64x512xf32, #tpu.memory_space<vmem>>) attributes {dimension_semantics = [], scalar_prefetch = 0 : i64, scratch_operands = 1 : i64, tpu.core_type = #tpu.core_type<tc>} {
    %c0 = arith.constant 0 : index
    %c0_0 = arith.constant 0 : index
    %0 = vector.load %arg0[%c0, %c0_0] : memref<64x16xf32, #tpu.memory_space<vmem>>, vector<64x16xf32>
    %c0_1 = arith.constant 0 : index
    %c0_2 = arith.constant 0 : index
    %1 = vector.load %arg2[%c0_1, %c0_2] : memref<16x32xf32, #tpu.memory_space<vmem>>, vector<16x32xf32>
    %cst = arith.constant dense<0.000000e+00> : vector<64x32xf32>
    %2 = tpu.matmul %0, %1, %cst {dimension_numbers = #tpu.dot_dimension_numbers<[1], [0], [0], [1], [0, 0, 1, 1], [], []>} : vector<64x16xf32>, vector<16x32xf32>, vector<64x32xf32> -> vector<64x32xf32>
    %c0_3 = arith.constant 0 : index
    %c0_4 = arith.constant 0 : index
    %3 = vector.load %arg3[%c0_3, %c0_4] : memref<1x32xf32, #tpu.memory_space<vmem>>, vector<1x32xf32>
    %4 = vector.broadcast %3 : vector<1x32xf32> to vector<64x32xf32>
    %5 = arith.addf %2, %4 : vector<64x32xf32>
    %cst_5 = arith.constant 0.000000e+00 : f32
    %6 = vector.broadcast %cst_5 : f32 to vector<64x32xf32>
    %7 = arith.maximumf %5, %6 : vector<64x32xf32>
    %c0_6 = arith.constant 0 : index
    %c0_7 = arith.constant 0 : index
    %8 = vector.load %arg4[%c0_6, %c0_7] : memref<32x512xf32, #tpu.memory_space<vmem>>, vector<32x512xf32>
    %cst_8 = arith.constant dense<0.000000e+00> : vector<64x512xf32>
    %9 = tpu.matmul %7, %8, %cst_8 {dimension_numbers = #tpu.dot_dimension_numbers<[1], [0], [0], [1], [0, 0, 1, 1], [], []>} : vector<64x32xf32>, vector<32x512xf32>, vector<64x512xf32> -> vector<64x512xf32>
    %c0_9 = arith.constant 0 : index
    %c0_10 = arith.constant 0 : index
    %10 = vector.load %arg6[%c0_9, %c0_10] : memref<1x512xf32, #tpu.memory_space<vmem>>, vector<1x512xf32>
    %11 = vector.broadcast %10 : vector<1x512xf32> to vector<64x512xf32>
    %12 = arith.addf %9, %11 : vector<64x512xf32>
    %c0_11 = arith.constant 0 : index
    %c0_12 = arith.constant 0 : index
    %13 = vector.load %arg10[%c0_11, %c0_12] : memref<64x512xf32, #tpu.memory_space<vmem>>, vector<64x512xf32>
    tpu.vector_store %arg10[%c0_11, %c0_12], %12 {strides = array<i32>} : memref<64x512xf32, #tpu.memory_space<vmem>>, vector<64x512xf32>,
    %cst_13 = arith.constant 0.000000e+00 : f32
    %14 = vector.broadcast %cst_13 : f32 to vector<8x128xf32>
    %cst_14 = arith.constant 0.000000e+00 : f32
    %15 = vector.broadcast %cst_14 : f32 to vector<8x128xf32>
    %cst_15 = arith.constant 0.000000e+00 : f32
    %16 = vector.broadcast %cst_15 : f32 to vector<8x128xf32>
    %c0_16 = arith.constant 0 : index
    %c0_17 = arith.constant 0 : index
    %17 = vector.load %arg10[%c0_16, %c0_17] : memref<64x512xf32, #tpu.memory_space<vmem>>, vector<8x512xf32>
    %c0_18 = arith.constant 0 : index
    %c0_19 = arith.constant 0 : index
    %18 = vector.load %arg5[%c0_18, %c0_19] : memref<128x512xf32, #tpu.memory_space<vmem>>, vector<128x512xf32>
    %cst_20 = arith.constant dense<0.000000e+00> : vector<8x512xf32>
    %19 = tpu.matmul %14, %18, %cst_20 {dimension_numbers = #tpu.dot_dimension_numbers<[1], [0], [0], [1], [0, 0, 1, 1], [], []>} : vector<8x128xf32>, vector<128x512xf32>, vector<8x512xf32> -> vector<8x512xf32>
    %20 = arith.addf %17, %19 : vector<8x512xf32>
    %21 = vector.extract_strided_slice %20 {offsets = [0, 0], sizes = [8, 128], strides = [1, 1]} : vector<8x512xf32> to vector<8x128xf32>
    %22 = arith.negf %21 : vector<8x128xf32>
    %23 = math.exp %22 : vector<8x128xf32>
    %cst_21 = arith.constant 1.000000e+00 : f32
    %24 = vector.broadcast %cst_21 : f32 to vector<8x128xf32>
    %25 = arith.addf %24, %23 : vector<8x128xf32>
    %26 = arith.divf %24, %25 : vector<8x128xf32>
    %27 = vector.extract_strided_slice %20 {offsets = [0, 128], sizes = [8, 128], strides = [1, 1]} : vector<8x512xf32> to vector<8x128xf32>
    %28 = arith.negf %27 : vector<8x128xf32>
    %29 = math.exp %28 : vector<8x128xf32>
    %cst_22 = arith.constant 1.000000e+00 : f32
    %30 = vector.broadcast %cst_22 : f32 to vector<8x128xf32>
    %31 = arith.addf %30, %29 : vector<8x128xf32>
    %32 = arith.divf %30, %31 : vector<8x128xf32>
    %33 = vector.extract_strided_slice %20 {offsets = [0, 256], sizes = [8, 128], strides = [1, 1]} : vector<8x512xf32> to vector<8x128xf32>
    %34 = math.tanh %33 : vector<8x128xf32>
    %35 = vector.extract_strided_slice %20 {offsets = [0, 384], sizes = [8, 128], strides = [1, 1]} : vector<8x512xf32> to vector<8x128xf32>
    %36 = arith.negf %35 : vector<8x128xf32>
    %37 = math.exp %36 : vector<8x128xf32>
    %cst_23 = arith.constant 1.000000e+00 : f32
    %38 = vector.broadcast %cst_23 : f32 to vector<8x128xf32>
    %39 = arith.addf %38, %37 : vector<8x128xf32>
    %40 = arith.divf %38, %39 : vector<8x128xf32>
    %41 = arith.mulf %32, %15 : vector<8x128xf32>
    %42 = arith.mulf %26, %34 : vector<8x128xf32>
    %43 = arith.addf %41, %42 : vector<8x128xf32>
    %44 = math.tanh %43 : vector<8x128xf32>
    %45 = arith.mulf %40, %44 : vector<8x128xf32>
    %c0_24 = arith.constant 0 : index
    %c0_25 = arith.constant 0 : index
    %46 = vector.load %arg1[%c0_24, %c0_25] : memref<64x1xf32, #tpu.memory_space<vmem>>, vector<8x1xf32>
    %47 = vector.broadcast %46 : vector<8x1xf32> to vector<8x128xf32>
    %48 = arith.mulf %45, %47 : vector<8x128xf32>
    %49 = arith.addf %16, %48 : vector<8x128xf32>
    %c8 = arith.constant 8 : index
    %c0_26 = arith.constant 0 : index
    %50 = vector.load %arg10[%c8, %c0_26] : memref<64x512xf32, #tpu.memory_space<vmem>>, vector<8x512xf32>
    %c0_27 = arith.constant 0 : index
    %c0_28 = arith.constant 0 : index
    %51 = vector.load %arg5[%c0_27, %c0_28] : memref<128x512xf32, #tpu.memory_space<vmem>>, vector<128x512xf32>
    %cst_29 = arith.constant dense<0.000000e+00> : vector<8x512xf32>
    %52 = tpu.matmul %45, %51, %cst_29 {dimension_numbers = #tpu.dot_dimension_numbers<[1], [0], [0], [1], [0, 0, 1, 1], [], []>} : vector<8x128xf32>, vector<128x512xf32>, vector<8x512xf32> -> vector<8x512xf32>
    %53 = arith.addf %50, %52 : vector<8x512xf32>
    %54 = vector.extract_strided_slice %53 {offsets = [0, 0], sizes = [8, 128], strides = [1, 1]} : vector<8x512xf32> to vector<8x128xf32>
    %55 = arith.negf %54 : vector<8x128xf32>
    %56 = math.exp %55 : vector<8x128xf32>
    %cst_30 = arith.constant 1.000000e+00 : f32
    %57 = vector.broadcast %cst_30 : f32 to vector<8x128xf32>
    %58 = arith.addf %57, %56 : vector<8x128xf32>
    %59 = arith.divf %57, %58 : vector<8x128xf32>
    %60 = vector.extract_strided_slice %53 {offsets = [0, 128], sizes = [8, 128], strides = [1, 1]} : vector<8x512xf32> to vector<8x128xf32>
    %61 = arith.negf %60 : vector<8x128xf32>
    %62 = math.exp %61 : vector<8x128xf32>
    %cst_31 = arith.constant 1.000000e+00 : f32
    %63 = vector.broadcast %cst_31 : f32 to vector<8x128xf32>
    %64 = arith.addf %63, %62 : vector<8x128xf32>
    %65 = arith.divf %63, %64 : vector<8x128xf32>
    %66 = vector.extract_strided_slice %53 {offsets = [0, 256], sizes = [8, 128], strides = [1, 1]} : vector<8x512xf32> to vector<8x128xf32>
    %67 = math.tanh %66 : vector<8x128xf32>
    %68 = vector.extract_strided_slice %53 {offsets = [0, 384], sizes = [8, 128], strides = [1, 1]} : vector<8x512xf32> to vector<8x128xf32>
    %69 = arith.negf %68 : vector<8x128xf32>
    %70 = math.exp %69 : vector<8x128xf32>
    %cst_32 = arith.constant 1.000000e+00 : f32
    %71 = vector.broadcast %cst_32 : f32 to vector<8x128xf32>
    %72 = arith.addf %71, %70 : vector<8x128xf32>
    %73 = arith.divf %71, %72 : vector<8x128xf32>
    %74 = arith.mulf %65, %43 : vector<8x128xf32>
    %75 = arith.mulf %59, %67 : vector<8x128xf32>
    %76 = arith.addf %74, %75 : vector<8x128xf32>
    %77 = math.tanh %76 : vector<8x128xf32>
    %78 = arith.mulf %73, %77 : vector<8x128xf32>
    %c8_33 = arith.constant 8 : index
    %c0_34 = arith.constant 0 : index
    %79 = vector.load %arg1[%c8_33, %c0_34] : memref<64x1xf32, #tpu.memory_space<vmem>>, vector<8x1xf32>
    %80 = vector.broadcast %79 : vector<8x1xf32> to vector<8x128xf32>
    %81 = arith.mulf %78, %80 : vector<8x128xf32>
    %82 = arith.addf %49, %81 : vector<8x128xf32>
    %c16 = arith.constant 16 : index
    %c0_35 = arith.constant 0 : index
    %83 = vector.load %arg10[%c16, %c0_35] : memref<64x512xf32, #tpu.memory_space<vmem>>, vector<8x512xf32>
    %c0_36 = arith.constant 0 : index
    %c0_37 = arith.constant 0 : index
    %84 = vector.load %arg5[%c0_36, %c0_37] : memref<128x512xf32, #tpu.memory_space<vmem>>, vector<128x512xf32>
    %cst_38 = arith.constant dense<0.000000e+00> : vector<8x512xf32>
    %85 = tpu.matmul %78, %84, %cst_38 {dimension_numbers = #tpu.dot_dimension_numbers<[1], [0], [0], [1], [0, 0, 1, 1], [], []>} : vector<8x128xf32>, vector<128x512xf32>, vector<8x512xf32> -> vector<8x512xf32>
    %86 = arith.addf %83, %85 : vector<8x512xf32>
    %87 = vector.extract_strided_slice %86 {offsets = [0, 0], sizes = [8, 128], strides = [1, 1]} : vector<8x512xf32> to vector<8x128xf32>
    %88 = arith.negf %87 : vector<8x128xf32>
    %89 = math.exp %88 : vector<8x128xf32>
    %cst_39 = arith.constant 1.000000e+00 : f32
    %90 = vector.broadcast %cst_39 : f32 to vector<8x128xf32>
    %91 = arith.addf %90, %89 : vector<8x128xf32>
    %92 = arith.divf %90, %91 : vector<8x128xf32>
    %93 = vector.extract_strided_slice %86 {offsets = [0, 128], sizes = [8, 128], strides = [1, 1]} : vector<8x512xf32> to vector<8x128xf32>
    %94 = arith.negf %93 : vector<8x128xf32>
    %95 = math.exp %94 : vector<8x128xf32>
    %cst_40 = arith.constant 1.000000e+00 : f32
    %96 = vector.broadcast %cst_40 : f32 to vector<8x128xf32>
    %97 = arith.addf %96, %95 : vector<8x128xf32>
    %98 = arith.divf %96, %97 : vector<8x128xf32>
    %99 = vector.extract_strided_slice %86 {offsets = [0, 256], sizes = [8, 128], strides = [1, 1]} : vector<8x512xf32> to vector<8x128xf32>
    %100 = math.tanh %99 : vector<8x128xf32>
    %101 = vector.extract_strided_slice %86 {offsets = [0, 384], sizes = [8, 128], strides = [1, 1]} : vector<8x512xf32> to vector<8x128xf32>
    %102 = arith.negf %101 : vector<8x128xf32>
    %103 = math.exp %102 : vector<8x128xf32>
    %cst_41 = arith.constant 1.000000e+00 : f32
    %104 = vector.broadcast %cst_41 : f32 to vector<8x128xf32>
    %105 = arith.addf %104, %103 : vector<8x128xf32>
    %106 = arith.divf %104, %105 : vector<8x128xf32>
    %107 = arith.mulf %98, %76 : vector<8x128xf32>
    %108 = arith.mulf %92, %100 : vector<8x128xf32>
    %109 = arith.addf %107, %108 : vector<8x128xf32>
    %110 = math.tanh %109 : vector<8x128xf32>
    %111 = arith.mulf %106, %110 : vector<8x128xf32>
    %c16_42 = arith.constant 16 : index
    %c0_43 = arith.constant 0 : index
    %112 = vector.load %arg1[%c16_42, %c0_43] : memref<64x1xf32, #tpu.memory_space<vmem>>, vector<8x1xf32>
    %113 = vector.broadcast %112 : vector<8x1xf32> to vector<8x128xf32>
    %114 = arith.mulf %111, %113 : vector<8x128xf32>
    %115 = arith.addf %82, %114 : vector<8x128xf32>
    %c24 = arith.constant 24 : index
    %c0_44 = arith.constant 0 : index
    %116 = vector.load %arg10[%c24, %c0_44] : memref<64x512xf32, #tpu.memory_space<vmem>>, vector<8x512xf32>
    %c0_45 = arith.constant 0 : index
    %c0_46 = arith.constant 0 : index
    %117 = vector.load %arg5[%c0_45, %c0_46] : memref<128x512xf32, #tpu.memory_space<vmem>>, vector<128x512xf32>
    %cst_47 = arith.constant dense<0.000000e+00> : vector<8x512xf32>
    %118 = tpu.matmul %111, %117, %cst_47 {dimension_numbers = #tpu.dot_dimension_numbers<[1], [0], [0], [1], [0, 0, 1, 1], [], []>} : vector<8x128xf32>, vector<128x512xf32>, vector<8x512xf32> -> vector<8x512xf32>
    %119 = arith.addf %116, %118 : vector<8x512xf32>
    %120 = vector.extract_strided_slice %119 {offsets = [0, 0], sizes = [8, 128], strides = [1, 1]} : vector<8x512xf32> to vector<8x128xf32>
    %121 = arith.negf %120 : vector<8x128xf32>
    %122 = math.exp %121 : vector<8x128xf32>
    %cst_48 = arith.constant 1.000000e+00 : f32
    %123 = vector.broadcast %cst_48 : f32 to vector<8x128xf32>
    %124 = arith.addf %123, %122 : vector<8x128xf32>
    %125 = arith.divf %123, %124 : vector<8x128xf32>
    %126 = vector.extract_strided_slice %119 {offsets = [0, 128], sizes = [8, 128], strides = [1, 1]} : vector<8x512xf32> to vector<8x128xf32>
    %127 = arith.negf %126 : vector<8x128xf32>
    %128 = math.exp %127 : vector<8x128xf32>
    %cst_49 = arith.constant 1.000000e+00 : f32
    %129 = vector.broadcast %cst_49 : f32 to vector<8x128xf32>
    %130 = arith.addf %129, %128 : vector<8x128xf32>
    %131 = arith.divf %129, %130 : vector<8x128xf32>
    %132 = vector.extract_strided_slice %119 {offsets = [0, 256], sizes = [8, 128], strides = [1, 1]} : vector<8x512xf32> to vector<8x128xf32>
    %133 = math.tanh %132 : vector<8x128xf32>
    %134 = vector.extract_strided_slice %119 {offsets = [0, 384], sizes = [8, 128], strides = [1, 1]} : vector<8x512xf32> to vector<8x128xf32>
    %135 = arith.negf %134 : vector<8x128xf32>
    %136 = math.exp %135 : vector<8x128xf32>
    %cst_50 = arith.constant 1.000000e+00 : f32
    %137 = vector.broadcast %cst_50 : f32 to vector<8x128xf32>
    %138 = arith.addf %137, %136 : vector<8x128xf32>
    %139 = arith.divf %137, %138 : vector<8x128xf32>
    %140 = arith.mulf %131, %109 : vector<8x128xf32>
    %141 = arith.mulf %125, %133 : vector<8x128xf32>
    %142 = arith.addf %140, %141 : vector<8x128xf32>
    %143 = math.tanh %142 : vector<8x128xf32>
    %144 = arith.mulf %139, %143 : vector<8x128xf32>
    %c24_51 = arith.constant 24 : index
    %c0_52 = arith.constant 0 : index
    %145 = vector.load %arg1[%c24_51, %c0_52] : memref<64x1xf32, #tpu.memory_space<vmem>>, vector<8x1xf32>
    %146 = vector.broadcast %145 : vector<8x1xf32> to vector<8x128xf32>
    %147 = arith.mulf %144, %146 : vector<8x128xf32>
    %148 = arith.addf %115, %147 : vector<8x128xf32>
    %c32 = arith.constant 32 : index
    %c0_53 = arith.constant 0 : index
    %149 = vector.load %arg10[%c32, %c0_53] : memref<64x512xf32, #tpu.memory_space<vmem>>, vector<8x512xf32>
    %c0_54 = arith.constant 0 : index
    %c0_55 = arith.constant 0 : index
    %150 = vector.load %arg5[%c0_54, %c0_55] : memref<128x512xf32, #tpu.memory_space<vmem>>, vector<128x512xf32>
    %cst_56 = arith.constant dense<0.000000e+00> : vector<8x512xf32>
    %151 = tpu.matmul %144, %150, %cst_56 {dimension_numbers = #tpu.dot_dimension_numbers<[1], [0], [0], [1], [0, 0, 1, 1], [], []>} : vector<8x128xf32>, vector<128x512xf32>, vector<8x512xf32> -> vector<8x512xf32>
    %152 = arith.addf %149, %151 : vector<8x512xf32>
    %153 = vector.extract_strided_slice %152 {offsets = [0, 0], sizes = [8, 128], strides = [1, 1]} : vector<8x512xf32> to vector<8x128xf32>
    %154 = arith.negf %153 : vector<8x128xf32>
    %155 = math.exp %154 : vector<8x128xf32>
    %cst_57 = arith.constant 1.000000e+00 : f32
    %156 = vector.broadcast %cst_57 : f32 to vector<8x128xf32>
    %157 = arith.addf %156, %155 : vector<8x128xf32>
    %158 = arith.divf %156, %157 : vector<8x128xf32>
    %159 = vector.extract_strided_slice %152 {offsets = [0, 128], sizes = [8, 128], strides = [1, 1]} : vector<8x512xf32> to vector<8x128xf32>
    %160 = arith.negf %159 : vector<8x128xf32>
    %161 = math.exp %160 : vector<8x128xf32>
    %cst_58 = arith.constant 1.000000e+00 : f32
    %162 = vector.broadcast %cst_58 : f32 to vector<8x128xf32>
    %163 = arith.addf %162, %161 : vector<8x128xf32>
    %164 = arith.divf %162, %163 : vector<8x128xf32>
    %165 = vector.extract_strided_slice %152 {offsets = [0, 256], sizes = [8, 128], strides = [1, 1]} : vector<8x512xf32> to vector<8x128xf32>
    %166 = math.tanh %165 : vector<8x128xf32>
    %167 = vector.extract_strided_slice %152 {offsets = [0, 384], sizes = [8, 128], strides = [1, 1]} : vector<8x512xf32> to vector<8x128xf32>
    %168 = arith.negf %167 : vector<8x128xf32>
    %169 = math.exp %168 : vector<8x128xf32>
    %cst_59 = arith.constant 1.000000e+00 : f32
    %170 = vector.broadcast %cst_59 : f32 to vector<8x128xf32>
    %171 = arith.addf %170, %169 : vector<8x128xf32>
    %172 = arith.divf %170, %171 : vector<8x128xf32>
    %173 = arith.mulf %164, %142 : vector<8x128xf32>
    %174 = arith.mulf %158, %166 : vector<8x128xf32>
    %175 = arith.addf %173, %174 : vector<8x128xf32>
    %176 = math.tanh %175 : vector<8x128xf32>
    %177 = arith.mulf %172, %176 : vector<8x128xf32>
    %c32_60 = arith.constant 32 : index
    %c0_61 = arith.constant 0 : index
    %178 = vector.load %arg1[%c32_60, %c0_61] : memref<64x1xf32, #tpu.memory_space<vmem>>, vector<8x1xf32>
    %179 = vector.broadcast %178 : vector<8x1xf32> to vector<8x128xf32>
    %180 = arith.mulf %177, %179 : vector<8x128xf32>
    %181 = arith.addf %148, %180 : vector<8x128xf32>
    %c40 = arith.constant 40 : index
    %c0_62 = arith.constant 0 : index
    %182 = vector.load %arg10[%c40, %c0_62] : memref<64x512xf32, #tpu.memory_space<vmem>>, vector<8x512xf32>
    %c0_63 = arith.constant 0 : index
    %c0_64 = arith.constant 0 : index
    %183 = vector.load %arg5[%c0_63, %c0_64] : memref<128x512xf32, #tpu.memory_space<vmem>>, vector<128x512xf32>
    %cst_65 = arith.constant dense<0.000000e+00> : vector<8x512xf32>
    %184 = tpu.matmul %177, %183, %cst_65 {dimension_numbers = #tpu.dot_dimension_numbers<[1], [0], [0], [1], [0, 0, 1, 1], [], []>} : vector<8x128xf32>, vector<128x512xf32>, vector<8x512xf32> -> vector<8x512xf32>
    %185 = arith.addf %182, %184 : vector<8x512xf32>
    %186 = vector.extract_strided_slice %185 {offsets = [0, 0], sizes = [8, 128], strides = [1, 1]} : vector<8x512xf32> to vector<8x128xf32>
    %187 = arith.negf %186 : vector<8x128xf32>
    %188 = math.exp %187 : vector<8x128xf32>
    %cst_66 = arith.constant 1.000000e+00 : f32
    %189 = vector.broadcast %cst_66 : f32 to vector<8x128xf32>
    %190 = arith.addf %189, %188 : vector<8x128xf32>
    %191 = arith.divf %189, %190 : vector<8x128xf32>
    %192 = vector.extract_strided_slice %185 {offsets = [0, 128], sizes = [8, 128], strides = [1, 1]} : vector<8x512xf32> to vector<8x128xf32>
    %193 = arith.negf %192 : vector<8x128xf32>
    %194 = math.exp %193 : vector<8x128xf32>
    %cst_67 = arith.constant 1.000000e+00 : f32
    %195 = vector.broadcast %cst_67 : f32 to vector<8x128xf32>
    %196 = arith.addf %195, %194 : vector<8x128xf32>
    %197 = arith.divf %195, %196 : vector<8x128xf32>
    %198 = vector.extract_strided_slice %185 {offsets = [0, 256], sizes = [8, 128], strides = [1, 1]} : vector<8x512xf32> to vector<8x128xf32>
    %199 = math.tanh %198 : vector<8x128xf32>
    %200 = vector.extract_strided_slice %185 {offsets = [0, 384], sizes = [8, 128], strides = [1, 1]} : vector<8x512xf32> to vector<8x128xf32>
    %201 = arith.negf %200 : vector<8x128xf32>
    %202 = math.exp %201 : vector<8x128xf32>
    %cst_68 = arith.constant 1.000000e+00 : f32
    %203 = vector.broadcast %cst_68 : f32 to vector<8x128xf32>
    %204 = arith.addf %203, %202 : vector<8x128xf32>
    %205 = arith.divf %203, %204 : vector<8x128xf32>
    %206 = arith.mulf %197, %175 : vector<8x128xf32>
    %207 = arith.mulf %191, %199 : vector<8x128xf32>
    %208 = arith.addf %206, %207 : vector<8x128xf32>
    %209 = math.tanh %208 : vector<8x128xf32>
    %210 = arith.mulf %205, %209 : vector<8x128xf32>
    %c40_69 = arith.constant 40 : index
    %c0_70 = arith.constant 0 : index
    %211 = vector.load %arg1[%c40_69, %c0_70] : memref<64x1xf32, #tpu.memory_space<vmem>>, vector<8x1xf32>
    %212 = vector.broadcast %211 : vector<8x1xf32> to vector<8x128xf32>
    %213 = arith.mulf %210, %212 : vector<8x128xf32>
    %214 = arith.addf %181, %213 : vector<8x128xf32>
    %c48 = arith.constant 48 : index
    %c0_71 = arith.constant 0 : index
    %215 = vector.load %arg10[%c48, %c0_71] : memref<64x512xf32, #tpu.memory_space<vmem>>, vector<8x512xf32>
    %c0_72 = arith.constant 0 : index
    %c0_73 = arith.constant 0 : index
    %216 = vector.load %arg5[%c0_72, %c0_73] : memref<128x512xf32, #tpu.memory_space<vmem>>, vector<128x512xf32>
    %cst_74 = arith.constant dense<0.000000e+00> : vector<8x512xf32>
    %217 = tpu.matmul %210, %216, %cst_74 {dimension_numbers = #tpu.dot_dimension_numbers<[1], [0], [0], [1], [0, 0, 1, 1], [], []>} : vector<8x128xf32>, vector<128x512xf32>, vector<8x512xf32> -> vector<8x512xf32>
    %218 = arith.addf %215, %217 : vector<8x512xf32>
    %219 = vector.extract_strided_slice %218 {offsets = [0, 0], sizes = [8, 128], strides = [1, 1]} : vector<8x512xf32> to vector<8x128xf32>
    %220 = arith.negf %219 : vector<8x128xf32>
    %221 = math.exp %220 : vector<8x128xf32>
    %cst_75 = arith.constant 1.000000e+00 : f32
    %222 = vector.broadcast %cst_75 : f32 to vector<8x128xf32>
    %223 = arith.addf %222, %221 : vector<8x128xf32>
    %224 = arith.divf %222, %223 : vector<8x128xf32>
    %225 = vector.extract_strided_slice %218 {offsets = [0, 128], sizes = [8, 128], strides = [1, 1]} : vector<8x512xf32> to vector<8x128xf32>
    %226 = arith.negf %225 : vector<8x128xf32>
    %227 = math.exp %226 : vector<8x128xf32>
    %cst_76 = arith.constant 1.000000e+00 : f32
    %228 = vector.broadcast %cst_76 : f32 to vector<8x128xf32>
    %229 = arith.addf %228, %227 : vector<8x128xf32>
    %230 = arith.divf %228, %229 : vector<8x128xf32>
    %231 = vector.extract_strided_slice %218 {offsets = [0, 256], sizes = [8, 128], strides = [1, 1]} : vector<8x512xf32> to vector<8x128xf32>
    %232 = math.tanh %231 : vector<8x128xf32>
    %233 = vector.extract_strided_slice %218 {offsets = [0, 384], sizes = [8, 128], strides = [1, 1]} : vector<8x512xf32> to vector<8x128xf32>
    %234 = arith.negf %233 : vector<8x128xf32>
    %235 = math.exp %234 : vector<8x128xf32>
    %cst_77 = arith.constant 1.000000e+00 : f32
    %236 = vector.broadcast %cst_77 : f32 to vector<8x128xf32>
    %237 = arith.addf %236, %235 : vector<8x128xf32>
    %238 = arith.divf %236, %237 : vector<8x128xf32>
    %239 = arith.mulf %230, %208 : vector<8x128xf32>
    %240 = arith.mulf %224, %232 : vector<8x128xf32>
    %241 = arith.addf %239, %240 : vector<8x128xf32>
    %242 = math.tanh %241 : vector<8x128xf32>
    %243 = arith.mulf %238, %242 : vector<8x128xf32>
    %c48_78 = arith.constant 48 : index
    %c0_79 = arith.constant 0 : index
    %244 = vector.load %arg1[%c48_78, %c0_79] : memref<64x1xf32, #tpu.memory_space<vmem>>, vector<8x1xf32>
    %245 = vector.broadcast %244 : vector<8x1xf32> to vector<8x128xf32>
    %246 = arith.mulf %243, %245 : vector<8x128xf32>
    %247 = arith.addf %214, %246 : vector<8x128xf32>
    %c56 = arith.constant 56 : index
    %c0_80 = arith.constant 0 : index
    %248 = vector.load %arg10[%c56, %c0_80] : memref<64x512xf32, #tpu.memory_space<vmem>>, vector<8x512xf32>
    %c0_81 = arith.constant 0 : index
    %c0_82 = arith.constant 0 : index
    %249 = vector.load %arg5[%c0_81, %c0_82] : memref<128x512xf32, #tpu.memory_space<vmem>>, vector<128x512xf32>
    %cst_83 = arith.constant dense<0.000000e+00> : vector<8x512xf32>
    %250 = tpu.matmul %243, %249, %cst_83 {dimension_numbers = #tpu.dot_dimension_numbers<[1], [0], [0], [1], [0, 0, 1, 1], [], []>} : vector<8x128xf32>, vector<128x512xf32>, vector<8x512xf32> -> vector<8x512xf32>
    %251 = arith.addf %248, %250 : vector<8x512xf32>
    %252 = vector.extract_strided_slice %251 {offsets = [0, 0], sizes = [8, 128], strides = [1, 1]} : vector<8x512xf32> to vector<8x128xf32>
    %253 = arith.negf %252 : vector<8x128xf32>
    %254 = math.exp %253 : vector<8x128xf32>
    %cst_84 = arith.constant 1.000000e+00 : f32
    %255 = vector.broadcast %cst_84 : f32 to vector<8x128xf32>
    %256 = arith.addf %255, %254 : vector<8x128xf32>
    %257 = arith.divf %255, %256 : vector<8x128xf32>
    %258 = vector.extract_strided_slice %251 {offsets = [0, 128], sizes = [8, 128], strides = [1, 1]} : vector<8x512xf32> to vector<8x128xf32>
    %259 = arith.negf %258 : vector<8x128xf32>
    %260 = math.exp %259 : vector<8x128xf32>
    %cst_85 = arith.constant 1.000000e+00 : f32
    %261 = vector.broadcast %cst_85 : f32 to vector<8x128xf32>
    %262 = arith.addf %261, %260 : vector<8x128xf32>
    %263 = arith.divf %261, %262 : vector<8x128xf32>
    %264 = vector.extract_strided_slice %251 {offsets = [0, 256], sizes = [8, 128], strides = [1, 1]} : vector<8x512xf32> to vector<8x128xf32>
    %265 = math.tanh %264 : vector<8x128xf32>
    %266 = vector.extract_strided_slice %251 {offsets = [0, 384], sizes = [8, 128], strides = [1, 1]} : vector<8x512xf32> to vector<8x128xf32>
    %267 = arith.negf %266 : vector<8x128xf32>
    %268 = math.exp %267 : vector<8x128xf32>
    %cst_86 = arith.constant 1.000000e+00 : f32
    %269 = vector.broadcast %cst_86 : f32 to vector<8x128xf32>
    %270 = arith.addf %269, %268 : vector<8x128xf32>
    %271 = arith.divf %269, %270 : vector<8x128xf32>
    %272 = arith.mulf %263, %241 : vector<8x128xf32>
    %273 = arith.mulf %257, %265 : vector<8x128xf32>
    %274 = arith.addf %272, %273 : vector<8x128xf32>
    %275 = math.tanh %274 : vector<8x128xf32>
    %276 = arith.mulf %271, %275 : vector<8x128xf32>
    %c56_87 = arith.constant 56 : index
    %c0_88 = arith.constant 0 : index
    %277 = vector.load %arg1[%c56_87, %c0_88] : memref<64x1xf32, #tpu.memory_space<vmem>>, vector<8x1xf32>
    %278 = vector.broadcast %277 : vector<8x1xf32> to vector<8x128xf32>
    %279 = arith.mulf %276, %278 : vector<8x128xf32>
    %280 = arith.addf %247, %279 : vector<8x128xf32>
    %c0_89 = arith.constant 0 : index
    %c0_90 = arith.constant 0 : index
    %281 = vector.load %arg7[%c0_89, %c0_90] : memref<128x128xf32, #tpu.memory_space<vmem>>, vector<128x128xf32>
    %cst_91 = arith.constant dense<0.000000e+00> : vector<8x128xf32>
    %282 = tpu.matmul %280, %281, %cst_91 {dimension_numbers = #tpu.dot_dimension_numbers<[1], [0], [0], [1], [0, 0, 1, 1], [], []>} : vector<8x128xf32>, vector<128x128xf32>, vector<8x128xf32> -> vector<8x128xf32>
    %c0_92 = arith.constant 0 : index
    %c0_93 = arith.constant 0 : index
    %283 = vector.load %arg8[%c0_92, %c0_93] : memref<1x128xf32, #tpu.memory_space<vmem>>, vector<1x128xf32>
    %284 = vector.broadcast %283 : vector<1x128xf32> to vector<8x128xf32>
    %285 = arith.addf %282, %284 : vector<8x128xf32>
    %c0_94 = arith.constant 0 : index
    %c0_95 = arith.constant 0 : index
    %286 = vector.load %arg9[%c0_94, %c0_95] : memref<8x128xf32, #tpu.memory_space<vmem>>, vector<8x128xf32>
    tpu.vector_store %arg9[%c0_94, %c0_95], %285 {strides = array<i32>} : memref<8x128xf32, #tpu.memory_space<vmem>>, vector<8x128xf32>,
    return
  }
}

</mosaic_0001>

<llo_original>
// kernel: lstm_forward.1
$region0: #{lstm_forward.1}
  #allocation0 [shape = 'u32[]', space=smem, size = 0x4, offset = 0x4, fixed_abs, tag = 'smem constant byte address 0x4 - core index']
  #allocation1 [shape = 'u32[144,128]{1,0:T(1,128)}', space=vmem, size = 0x12000, scoped, tag = 'internal scratch']
  #allocation2 [shape = 'f32[64,512]{1,0:T(8,128)}', space=vmem, size = 0x20000, scoped, tag = 'scratch operand']
  %s0 = inlined_call_operand.vmem [shape: f32[64,16], index: 0, kind: input, shape index: {}]
  %s1 = inlined_call_operand.vmem [shape: f32[64,1], index: 1, kind: input, shape index: {}]
  %s2 = inlined_call_operand.vmem [shape: f32[16,32], index: 2, kind: input, shape index: {}]
  %s3 = inlined_call_operand.vmem [shape: f32[1,32], index: 3, kind: input, shape index: {}]
  %s4 = inlined_call_operand.vmem [shape: f32[32,512], index: 4, kind: input, shape index: {}]
  %s5 = inlined_call_operand.vmem [shape: f32[128,512], index: 5, kind: input, shape index: {}]
  %s6 = inlined_call_operand.vmem [shape: f32[1,512], index: 6, kind: input, shape index: {}]
  %s7 = inlined_call_operand.vmem [shape: f32[128,128], index: 7, kind: input, shape index: {}]
  %s8 = inlined_call_operand.vmem [shape: f32[1,128], index: 8, kind: input, shape index: {}]
  %s9 = inlined_call_operand.vmem [shape: f32[8,128], index: 9, kind: output, shape index: {}]
  %s10 = sld [smem:[#allocation0]]
  $region46: #{lstm_forward.1} parent=0
    _
  %s12 = ssub.s32 1, %s10
  %s13 = scalar_select 0, %s12, %s10
  // Predicated region
  $region2: #{lstm_forward.1} parent=0 // pred_check
    _
  $region3: #{lstm_forward.1} parent=0 // pred_check_branch
    %15 = sbr.rel (0) target = $region5
  $region4: #{lstm_forward.1} parent=0 // pred_region
    _
  $region5: #{lstm_forward.1} parent=0 // pred_fallthru
    _
  // Predicated region
  $region6: #{lstm_forward.1} parent=0 // pred_check
    _
  $region7: #{lstm_forward.1} parent=0 // pred_check_branch
    %17 = sbr.rel (0) target = $region9
  $region8: #{lstm_forward.1} parent=0 // pred_region
    _
  $region9: #{lstm_forward.1} parent=0 // pred_fallthru
    _
  // Predicated region
  $region10: #{lstm_forward.1} parent=0 // pred_check
    _
  $region11: #{lstm_forward.1} parent=0 // pred_check_branch
    %19 = sbr.rel (0) target = $region13
  $region12: #{lstm_forward.1} parent=0 // pred_region
    _
  $region13: #{lstm_forward.1} parent=0 // pred_fallthru
    _
  // Predicated region
  $region14: #{lstm_forward.1} parent=0 // pred_check
    _
  $region15: #{lstm_forward.1} parent=0 // pred_check_branch
    %21 = sbr.rel (0) target = $region17
  $region16: #{lstm_forward.1} parent=0 // pred_region
    _
  $region17: #{lstm_forward.1} parent=0 // pred_fallthru
    _
  // Predicated region
  $region18: #{lstm_forward.1} parent=0 // pred_check
    _
  $region19: #{lstm_forward.1} parent=0 // pred_check_branch
    %23 = sbr.rel (0) target = $region21
  $region20: #{lstm_forward.1} parent=0 // pred_region
    _
  $region21: #{lstm_forward.1} parent=0 // pred_fallthru
    _
  // Predicated region
  $region22: #{lstm_forward.1} parent=0 // pred_check
    _
  $region23: #{lstm_forward.1} parent=0 // pred_check_branch
    %25 = sbr.rel (0) target = $region25
  $region24: #{lstm_forward.1} parent=0 // pred_region
    _
  $region25: #{lstm_forward.1} parent=0 // pred_fallthru
    _
  // Predicated region
  $region26: #{lstm_forward.1} parent=0 // pred_check
    _
  $region27: #{lstm_forward.1} parent=0 // pred_check_branch
    %27 = sbr.rel (0) target = $region29
  $region28: #{lstm_forward.1} parent=0 // pred_region
    _
  $region29: #{lstm_forward.1} parent=0 // pred_fallthru
    _
  // Predicated region
  $region30: #{lstm_forward.1} parent=0 // pred_check
    _
  $region31: #{lstm_forward.1} parent=0 // pred_check_branch
    %29 = sbr.rel (0) target = $region33
  $region32: #{lstm_forward.1} parent=0 // pred_region
    _
  $region33: #{lstm_forward.1} parent=0 // pred_fallthru
    _
  // Predicated region
  $region34: #{lstm_forward.1} parent=0 // pred_check
    _
  $region35: #{lstm_forward.1} parent=0 // pred_check_branch
    %31 = sbr.rel (0) target = $region37
  $region36: #{lstm_forward.1} parent=0 // pred_region
    _
  $region37: #{lstm_forward.1} parent=0 // pred_fallthru
    _
  %v32 = vld [vmem:[%s0] sm:$0xff]
  %v33 = vld [vmem:[%s0 + $0x8] sm:$0xff]
  %v34 = vld [vmem:[%s0 + $0x10] sm:$0xff]
  %v35 = vld [vmem:[%s0 + $0x18] sm:$0xff]
  %v36 = vld [vmem:[%s0 + $0x20] sm:$0xff]
  %v37 = vld [vmem:[%s0 + $0x28] sm:$0xff]
  %v38 = vld [vmem:[%s0 + $0x30] sm:$0xff]
  %v39 = vld [vmem:[%s0 + $0x38] sm:$0xff]
  %v40 = vld [vmem:[%s2] sm:$0xff]
  %v41 = vld [vmem:[%s2 + $0x8] sm:$0xff]
  %v42 = vld [vmem:[%s3] sm:$0x1]
  %v44 = vlaneseq
  %v45 = vshrl.u32 %v44, 7
  %v46 = vsub.s32 0, %v45
  %v47 = vrot.slane %v42, %v46
  %vm49 = vcmask 130048
  %v51 = vsel %vm49, %v32, 0
  %v54 = vsel %vm49, %v33, 0
  %v57 = vsel %vm49, %v34, 0
  %v60 = vsel %vm49, %v35, 0
  %v63 = vsel %vm49, %v36, 0
  %v66 = vsel %vm49, %v37, 0
  %v69 = vsel %vm49, %v38, 0
  %v72 = vsel %vm49, %v39, 0
  %74 = vmatprep.subr.mxu0 0.0
  %75 = vmatpush1.msra.mxu0 0.0
  %76 = vmatprep.subr.mxu0 0.0
  %77 = vmatpush1.msra.mxu0 0.0
  %78 = vmatprep.subr.mxu0 0.0
  %79 = vmatpush1.msra.mxu0 0.0
  %80 = vmatprep.subr.mxu0 0.0
  %81 = vmatpush1.msra.mxu0 0.0
  %82 = vmatprep.subr.mxu0 0.0
  %83 = vmatpush1.msra.mxu0 0.0
  %84 = vmatprep.subr.mxu0 0.0
  %85 = vmatpush1.msra.mxu0 0.0
  %86 = vmatprep.subr.mxu0 0.0
  %87 = vmatpush1.msra.mxu0 0.0
  %88 = vmatprep.subr.mxu0 0.0
  %89 = vmatpush1.msra.mxu0 0.0
  %90 = vmatprep.subr.mxu0 0.0
  %91 = vmatpush1.msra.mxu0 0.0
  %92 = vmatprep.subr.mxu0 0.0
  %93 = vmatpush1.msra.mxu0 0.0
  %94 = vmatprep.subr.mxu0 0.0
  %95 = vmatpush1.msra.mxu0 0.0
  %96 = vmatprep.subr.mxu0 0.0
  %97 = vmatpush1.msra.mxu0 0.0
  %98 = vmatprep.subr.mxu0 0.0
  %99 = vmatpush1.msra.mxu0 0.0
  %100 = vmatprep.subr.mxu0 0.0
  %101 = vmatpush1.msra.mxu0 0.0
  %102 = vmatprep.subr.mxu0 0.0
  %103 = vmatpush1.msra.mxu0 %v41
  %104 = vmatprep.subr.mxu0 0.0
  %105 = vmatpush1.msra.mxu0 %v40
  %106 = vmatprep.subr.mxu0 0.0
  %107 = vmatpush2.msra.mxu0 0.0
  %108 = vmatprep.subr.mxu0 0.0
  %109 = vmatpush2.msra.mxu0 0.0
  %110 = vmatprep.subr.mxu0 0.0
  %111 = vmatpush2.msra.mxu0 0.0
  %112 = vmatprep.subr.mxu0 0.0
  %113 = vmatpush2.msra.mxu0 0.0
  %114 = vmatprep.subr.mxu0 0.0
  %115 = vmatpush2.msra.mxu0 0.0
  %116 = vmatprep.subr.mxu0 0.0
  %117 = vmatpush2.msra.mxu0 0.0
  %118 = vmatprep.subr.mxu0 0.0
  %119 = vmatpush2.msra.mxu0 0.0
  %120 = vmatprep.subr.mxu0 0.0
  %121 = vmatpush2.msra.mxu0 0.0
  %122 = vmatprep.subr.mxu0 0.0
  %123 = vmatpush2.msra.mxu0 0.0
  %124 = vmatprep.subr.mxu0 0.0
  %125 = vmatpush2.msra.mxu0 0.0
  %126 = vmatprep.subr.mxu0 0.0
  %127 = vmatpush2.msra.mxu0 0.0
  %128 = vmatprep.subr.mxu0 0.0
  %129 = vmatpush2.msra.mxu0 0.0
  %130 = vmatprep.subr.mxu0 0.0
  %131 = vmatpush2.msra.mxu0 0.0
  %132 = vmatprep.subr.mxu0 0.0
  %133 = vmatpush2.msra.mxu0 0.0
  %134 = vmatprep.subr.mxu0 0.0
  %135 = vmatpush2.msra.mxu0 0.0
  %136 = vmatprep.subr.mxu0 0.0
  %137 = vmatpush2.msra.mxu0 0.0
  %138 = vmatprep.mubr.f32.mxu0 0.0
  %139 = vmatmul.mubr.f32.gmra.mxu0 %v51
  %v140 = vpop.f32.mrf.mxu0
  %v141 = vadd.f32 %v47, %v140
  %v142 = vpop.f32.mrf.mxu0
  %143 = vmatprep.mubr.f32.mxu0 0.0
  %144 = vmatmul.mubr.f32.gmra.mxu0 %v54
  %v145 = vpop.f32.mrf.mxu0
  %v146 = vadd.f32 %v47, %v145
  %v147 = vpop.f32.mrf.mxu0
  %148 = vmatprep.mubr.f32.mxu0 0.0
  %149 = vmatmul.mubr.f32.gmra.mxu0 %v57
  %v150 = vpop.f32.mrf.mxu0
  %v151 = vadd.f32 %v47, %v150
  %v152 = vpop.f32.mrf.mxu0
  %153 = vmatprep.mubr.f32.mxu0 0.0
  %154 = vmatmul.mubr.f32.gmra.mxu0 %v60
  %v155 = vpop.f32.mrf.mxu0
  %v156 = vadd.f32 %v47, %v155
  %v157 = vpop.f32.mrf.mxu0
  %158 = vmatprep.mubr.f32.mxu0 0.0
  %159 = vmatmul.mubr.f32.gmra.mxu0 %v63
  %v160 = vpop.f32.mrf.mxu0
  %v161 = vadd.f32 %v47, %v160
  %v162 = vpop.f32.mrf.mxu0
  %163 = vmatprep.mubr.f32.mxu0 0.0
  %164 = vmatmul.mubr.f32.gmra.mxu0 %v66
  %v165 = vpop.f32.mrf.mxu0
  %v166 = vadd.f32 %v47, %v165
  %v167 = vpop.f32.mrf.mxu0
  %168 = vmatprep.mubr.f32.mxu0 0.0
  %169 = vmatmul.mubr.f32.gmra.mxu0 %v69
  %v170 = vpop.f32.mrf.mxu0
  %v171 = vadd.f32 %v47, %v170
  %v172 = vpop.f32.mrf.mxu0
  %173 = vmatprep.mubr.f32.mxu0 0.0
  %174 = vmatmul.mubr.f32.gmra.mxu0 %v72
  %v175 = vpop.f32.mrf.mxu0
  %v176 = vadd.f32 %v47, %v175
  %v177 = vpop.f32.mrf.mxu0
  %178 = vdwg.mxu0
  %v179 = vmax.f32 %v141, 0.0
  %v180 = vmax.f32 %v146, 0.0
  %v181 = vmax.f32 %v151, 0.0
  %v182 = vmax.f32 %v156, 0.0
  %v183 = vmax.f32 %v161, 0.0
  %v184 = vmax.f32 %v166, 0.0
  %v185 = vmax.f32 %v171, 0.0
  %v186 = vmax.f32 %v176, 0.0
  %v187 = vld [vmem:[%s4] sm:$0xff]
  %v188 = vld [vmem:[%s4 + $0x8] sm:$0xff]
  %v189 = vld [vmem:[%s4 + $0x10] sm:$0xff]
  %v190 = vld [vmem:[%s4 + $0x18] sm:$0xff]
  %v191 = vld [vmem:[%s4 + $0x20] sm:$0xff]
  %v192 = vld [vmem:[%s4 + $0x28] sm:$0xff]
  %v193 = vld [vmem:[%s4 + $0x30] sm:$0xff]
  %v194 = vld [vmem:[%s4 + $0x38] sm:$0xff]
  %v195 = vld [vmem:[%s4 + $0x40] sm:$0xff]
  %v196 = vld [vmem:[%s4 + $0x48] sm:$0xff]
  %v197 = vld [vmem:[%s4 + $0x50] sm:$0xff]
  %v198 = vld [vmem:[%s4 + $0x58] sm:$0xff]
  %v199 = vld [vmem:[%s4 + $0x60] sm:$0xff]
  %v200 = vld [vmem:[%s4 + $0x68] sm:$0xff]
  %v201 = vld [vmem:[%s4 + $0x70] sm:$0xff]
  %v202 = vld [vmem:[%s4 + $0x78] sm:$0xff]
  %v203 = vld [vmem:[%s6] sm:$0xf]
  %v205 = vlaneseq
  %v206 = vshrl.u32 %v205, 7
  %v207 = vsub.s32 0, %v206
  %v208 = vrot.slane %v203, %v207
  %v209 = vlaneseq
  %v210 = vshrl.u32 %v209, 7
  %v211 = vsub.s32 1, %v210
  %v212 = vrot.slane %v203, %v211
  %v213 = vlaneseq
  %v214 = vshrl.u32 %v213, 7
  %v215 = vsub.s32 2, %v214
  %v216 = vrot.slane %v203, %v215
  %v217 = vlaneseq
  %v218 = vshrl.u32 %v217, 7
  %v219 = vsub.s32 3, %v218
  %v220 = vrot.slane %v203, %v219
  %vm225 = vcmask 261120
  %v227 = vsel %vm225, %v179, 0
  %v230 = vsel %vm225, %v180, 0
  %v233 = vsel %vm225, %v181, 0
  %v236 = vsel %vm225, %v182, 0
  %v239 = vsel %vm225, %v183, 0
  %v242 = vsel %vm225, %v184, 0
  %v245 = vsel %vm225, %v185, 0
  %v248 = vsel %vm225, %v186, 0
  %250 = vmatprep.subr.mxu0 0.0
  %251 = vmatpush1.msra.mxu0 0.0
  %252 = vmatprep.subr.mxu0 0.0
  %253 = vmatpush1.msra.mxu0 0.0
  %254 = vmatprep.subr.mxu0 0.0
  %255 = vmatpush1.msra.mxu0 0.0
  %256 = vmatprep.subr.mxu0 0.0
  %257 = vmatpush1.msra.mxu0 0.0
  %258 = vmatprep.subr.mxu0 0.0
  %259 = vmatpush1.msra.mxu0 0.0
  %260 = vmatprep.subr.mxu0 0.0
  %261 = vmatpush1.msra.mxu0 0.0
  %262 = vmatprep.subr.mxu0 0.0
  %263 = vmatpush1.msra.mxu0 0.0
  %264 = vmatprep.subr.mxu0 0.0
  %265 = vmatpush1.msra.mxu0 0.0
  %266 = vmatprep.subr.mxu0 0.0
  %267 = vmatpush1.msra.mxu0 0.0
  %268 = vmatprep.subr.mxu0 0.0
  %269 = vmatpush1.msra.mxu0 0.0
  %270 = vmatprep.subr.mxu0 0.0
  %271 = vmatpush1.msra.mxu0 0.0
  %272 = vmatprep.subr.mxu0 0.0
  %273 = vmatpush1.msra.mxu0 0.0
  %274 = vmatprep.subr.mxu0 %v200
  %275 = vmatpush1.msra.mxu0 %v199
  %276 = vmatprep.subr.mxu0 %v196
  %277 = vmatpush1.msra.mxu0 %v195
  %278 = vmatprep.subr.mxu0 %v192
  %279 = vmatpush1.msra.mxu0 %v191
  %280 = vmatprep.subr.mxu0 %v188
  %281 = vmatpush1.msra.mxu0 %v187
  %282 = vmatprep.subr.mxu0 0.0
  %283 = vmatpush2.msra.mxu0 0.0
  %284 = vmatprep.subr.mxu0 0.0
  %285 = vmatpush2.msra.mxu0 0.0
  %286 = vmatprep.subr.mxu0 0.0
  %287 = vmatpush2.msra.mxu0 0.0
  %288 = vmatprep.subr.mxu0 0.0
  %289 = vmatpush2.msra.mxu0 0.0
  %290 = vmatprep.subr.mxu0 0.0
  %291 = vmatpush2.msra.mxu0 0.0
  %292 = vmatprep.subr.mxu0 0.0
  %293 = vmatpush2.msra.mxu0 0.0
  %294 = vmatprep.subr.mxu0 0.0
  %295 = vmatpush2.msra.mxu0 0.0
  %296 = vmatprep.subr.mxu0 0.0
  %297 = vmatpush2.msra.mxu0 0.0
  %298 = vmatprep.subr.mxu0 0.0
  %299 = vmatpush2.msra.mxu0 0.0
  %300 = vmatprep.subr.mxu0 0.0
  %301 = vmatpush2.msra.mxu0 0.0
  %302 = vmatprep.subr.mxu0 0.0
  %303 = vmatpush2.msra.mxu0 0.0
  %304 = vmatprep.subr.mxu0 0.0
  %305 = vmatpush2.msra.mxu0 0.0
  %306 = vmatprep.subr.mxu0 0.0
  %307 = vmatpush2.msra.mxu0 0.0
  %308 = vmatprep.subr.mxu0 0.0
  %309 = vmatpush2.msra.mxu0 0.0
  %310 = vmatprep.subr.mxu0 0.0
  %311 = vmatpush2.msra.mxu0 0.0
  %312 = vmatprep.subr.mxu0 0.0
  %313 = vmatpush2.msra.mxu0 0.0
  %314 = vmatprep.mubr.f32.mxu0 0.0
  %315 = vmatmul.mubr.f32.gmra.mxu0 %v227
  %v316 = vpop.f32.mrf.mxu0
  %v317 = vadd.f32 %v208, %v316
  %v318 = vpop.f32.mrf.mxu0
  %v319 = vadd.f32 %v212, %v318
  %320 = vmatprep.mubr.f32.mxu0 0.0
  %321 = vmatmul.mubr.f32.gmra.mxu0 %v230
  %v322 = vpop.f32.mrf.mxu0
  %v323 = vadd.f32 %v208, %v322
  %v324 = vpop.f32.mrf.mxu0
  %v325 = vadd.f32 %v212, %v324
  %326 = vmatprep.mubr.f32.mxu0 0.0
  %327 = vmatmul.mubr.f32.gmra.mxu0 %v233
  %v328 = vpop.f32.mrf.mxu0
  %v329 = vadd.f32 %v208, %v328
  %v330 = vpop.f32.mrf.mxu0
  %v331 = vadd.f32 %v212, %v330
  %332 = vmatprep.mubr.f32.mxu0 0.0
  %333 = vmatmul.mubr.f32.gmra.mxu0 %v236
  %v334 = vpop.f32.mrf.mxu0
  %v335 = vadd.f32 %v208, %v334
  %v336 = vpop.f32.mrf.mxu0
  %v337 = vadd.f32 %v212, %v336
  %338 = vmatprep.mubr.f32.mxu0 0.0
  %339 = vmatmul.mubr.f32.gmra.mxu0 %v239
  %v340 = vpop.f32.mrf.mxu0
  %v341 = vadd.f32 %v208, %v340
  %v342 = vpop.f32.mrf.mxu0
  %v343 = vadd.f32 %v212, %v342
  %344 = vmatprep.mubr.f32.mxu0 0.0
  %345 = vmatmul.mubr.f32.gmra.mxu0 %v242
  %v346 = vpop.f32.mrf.mxu0
  %v347 = vadd.f32 %v208, %v346
  %v348 = vpop.f32.mrf.mxu0
  %v349 = vadd.f32 %v212, %v348
  %350 = vmatprep.mubr.f32.mxu0 0.0
  %351 = vmatmul.mubr.f32.gmra.mxu0 %v245
  %v352 = vpop.f32.mrf.mxu0
  %v353 = vadd.f32 %v208, %v352
  %v354 = vpop.f32.mrf.mxu0
  %v355 = vadd.f32 %v212, %v354
  %356 = vmatprep.mubr.f32.mxu0 0.0
  %357 = vmatmul.mubr.f32.gmra.mxu0 %v248
  %v358 = vpop.f32.mrf.mxu0
  %v359 = vadd.f32 %v208, %v358
  %v360 = vpop.f32.mrf.mxu0
  %v361 = vadd.f32 %v212, %v360
  %362 = vdwg.mxu0
  %363 = vmatprep.subr.mxu0 0.0
  %364 = vmatpush1.msra.mxu0 0.0
  %365 = vmatprep.subr.mxu0 0.0
  %366 = vmatpush1.msra.mxu0 0.0
  %367 = vmatprep.subr.mxu0 0.0
  %368 = vmatpush1.msra.mxu0 0.0
  %369 = vmatprep.subr.mxu0 0.0
  %370 = vmatpush1.msra.mxu0 0.0
  %371 = vmatprep.subr.mxu0 0.0
  %372 = vmatpush1.msra.mxu0 0.0
  %373 = vmatprep.subr.mxu0 0.0
  %374 = vmatpush1.msra.mxu0 0.0
  %375 = vmatprep.subr.mxu0 0.0
  %376 = vmatpush1.msra.mxu0 0.0
  %377 = vmatprep.subr.mxu0 0.0
  %378 = vmatpush1.msra.mxu0 0.0
  %379 = vmatprep.subr.mxu0 0.0
  %380 = vmatpush1.msra.mxu0 0.0
  %381 = vmatprep.subr.mxu0 0.0
  %382 = vmatpush1.msra.mxu0 0.0
  %383 = vmatprep.subr.mxu0 0.0
  %384 = vmatpush1.msra.mxu0 0.0
  %385 = vmatprep.subr.mxu0 0.0
  %386 = vmatpush1.msra.mxu0 0.0
  %387 = vmatprep.subr.mxu0 %v202
  %388 = vmatpush1.msra.mxu0 %v201
  %389 = vmatprep.subr.mxu0 %v198
  %390 = vmatpush1.msra.mxu0 %v197
  %391 = vmatprep.subr.mxu0 %v194
  %392 = vmatpush1.msra.mxu0 %v193
  %393 = vmatprep.subr.mxu0 %v190
  %394 = vmatpush1.msra.mxu0 %v189
  %395 = vmatprep.subr.mxu0 0.0
  %396 = vmatpush2.msra.mxu0 0.0
  %397 = vmatprep.subr.mxu0 0.0
  %398 = vmatpush2.msra.mxu0 0.0
  %399 = vmatprep.subr.mxu0 0.0
  %400 = vmatpush2.msra.mxu0 0.0
  %401 = vmatprep.subr.mxu0 0.0
  %402 = vmatpush2.msra.mxu0 0.0
  %403 = vmatprep.subr.mxu0 0.0
  %404 = vmatpush2.msra.mxu0 0.0
  %405 = vmatprep.subr.mxu0 0.0
  %406 = vmatpush2.msra.mxu0 0.0
  %407 = vmatprep.subr.mxu0 0.0
  %408 = vmatpush2.msra.mxu0 0.0
  %409 = vmatprep.subr.mxu0 0.0
  %410 = vmatpush2.msra.mxu0 0.0
  %411 = vmatprep.subr.mxu0 0.0
  %412 = vmatpush2.msra.mxu0 0.0
  %413 = vmatprep.subr.mxu0 0.0
  %414 = vmatpush2.msra.mxu0 0.0
  %415 = vmatprep.subr.mxu0 0.0
  %416 = vmatpush2.msra.mxu0 0.0
  %417 = vmatprep.subr.mxu0 0.0
  %418 = vmatpush2.msra.mxu0 0.0
  %419 = vmatprep.subr.mxu0 0.0
  %420 = vmatpush2.msra.mxu0 0.0
  %421 = vmatprep.subr.mxu0 0.0
  %422 = vmatpush2.msra.mxu0 0.0
  %423 = vmatprep.subr.mxu0 0.0
  %424 = vmatpush2.msra.mxu0 0.0
  %425 = vmatprep.subr.mxu0 0.0
  %426 = vmatpush2.msra.mxu0 0.0
  %427 = vmatprep.mubr.f32.mxu0 0.0
  %428 = vmatmul.mubr.f32.gmra.mxu0 %v227
  %v429 = vpop.f32.mrf.mxu0
  %v430 = vadd.f32 %v216, %v429
  %v431 = vpop.f32.mrf.mxu0
  %v432 = vadd.f32 %v220, %v431
  %433 = vmatprep.mubr.f32.mxu0 0.0
  %434 = vmatmul.mubr.f32.gmra.mxu0 %v230
  %v435 = vpop.f32.mrf.mxu0
  %v436 = vadd.f32 %v216, %v435
  %v437 = vpop.f32.mrf.mxu0
  %v438 = vadd.f32 %v220, %v437
  %439 = vmatprep.mubr.f32.mxu0 0.0
  %440 = vmatmul.mubr.f32.gmra.mxu0 %v233
  %v441 = vpop.f32.mrf.mxu0
  %v442 = vadd.f32 %v216, %v441
  %v443 = vpop.f32.mrf.mxu0
  %v444 = vadd.f32 %v220, %v443
  %445 = vmatprep.mubr.f32.mxu0 0.0
  %446 = vmatmul.mubr.f32.gmra.mxu0 %v236
  %v447 = vpop.f32.mrf.mxu0
  %v448 = vadd.f32 %v216, %v447
  %v449 = vpop.f32.mrf.mxu0
  %v450 = vadd.f32 %v220, %v449
  %451 = vmatprep.mubr.f32.mxu0 0.0
  %452 = vmatmul.mubr.f32.gmra.mxu0 %v239
  %v453 = vpop.f32.mrf.mxu0
  %v454 = vadd.f32 %v216, %v453
  %v455 = vpop.f32.mrf.mxu0
  %v456 = vadd.f32 %v220, %v455
  %457 = vmatprep.mubr.f32.mxu0 0.0
  %458 = vmatmul.mubr.f32.gmra.mxu0 %v242
  %v459 = vpop.f32.mrf.mxu0
  %v460 = vadd.f32 %v216, %v459
  %v461 = vpop.f32.mrf.mxu0
  %v462 = vadd.f32 %v220, %v461
  %463 = vmatprep.mubr.f32.mxu0 0.0
  %464 = vmatmul.mubr.f32.gmra.mxu0 %v245
  %v465 = vpop.f32.mrf.mxu0
  %v466 = vadd.f32 %v216, %v465
  %v467 = vpop.f32.mrf.mxu0
  %v468 = vadd.f32 %v220, %v467
  %469 = vmatprep.mubr.f32.mxu0 0.0
  %470 = vmatmul.mubr.f32.gmra.mxu0 %v248
  %v471 = vpop.f32.mrf.mxu0
  %v472 = vadd.f32 %v216, %v471
  %v473 = vpop.f32.mrf.mxu0
  %v474 = vadd.f32 %v220, %v473
  %475 = vdwg.mxu0
  %476 = vst [vmem:[#allocation2] sm:$0xff] %v317
  %477 = vst [vmem:[#allocation2 + $0x8] sm:$0xff] %v319
  %478 = vst [vmem:[#allocation2 + $0x10] sm:$0xff] %v430
  %479 = vst [vmem:[#allocation2 + $0x18] sm:$0xff] %v432
  %480 = vst [vmem:[#allocation2 + $0x20] sm:$0xff] %v323
  %481 = vst [vmem:[#allocation2 + $0x28] sm:$0xff] %v325
  %482 = vst [vmem:[#allocation2 + $0x30] sm:$0xff] %v436
  %483 = vst [vmem:[#allocation2 + $0x38] sm:$0xff] %v438
  %484 = vst [vmem:[#allocation2 + $0x40] sm:$0xff] %v329
  %485 = vst [vmem:[#allocation2 + $0x48] sm:$0xff] %v331
  %486 = vst [vmem:[#allocation2 + $0x50] sm:$0xff] %v442
  %487 = vst [vmem:[#allocation2 + $0x58] sm:$0xff] %v444
  %488 = vst [vmem:[#allocation2 + $0x60] sm:$0xff] %v335
  %489 = vst [vmem:[#allocation2 + $0x68] sm:$0xff] %v337
  %490 = vst [vmem:[#allocation2 + $0x70] sm:$0xff] %v448
  %491 = vst [vmem:[#allocation2 + $0x78] sm:$0xff] %v450
  %492 = vst [vmem:[#allocation2 + $0x80] sm:$0xff] %v341
  %493 = vst [vmem:[#allocation2 + $0x88] sm:$0xff] %v343
  %494 = vst [vmem:[#allocation2 + $0x90] sm:$0xff] %v454
  %495 = vst [vmem:[#allocation2 + $0x98] sm:$0xff] %v456
  %496 = vst [vmem:[#allocation2 + $0xa0] sm:$0xff] %v347
  %497 = vst [vmem:[#allocation2 + $0xa8] sm:$0xff] %v349
  %498 = vst [vmem:[#allocation2 + $0xb0] sm:$0xff] %v460
  %499 = vst [vmem:[#allocation2 + $0xb8] sm:$0xff] %v462
  %500 = vst [vmem:[#allocation2 + $0xc0] sm:$0xff] %v353
  %501 = vst [vmem:[#allocation2 + $0xc8] sm:$0xff] %v355
  %502 = vst [vmem:[#allocation2 + $0xd0] sm:$0xff] %v466
  %503 = vst [vmem:[#allocation2 + $0xd8] sm:$0xff] %v468
  %504 = vst [vmem:[#allocation2 + $0xe0] sm:$0xff] %v359
  %505 = vst [vmem:[#allocation2 + $0xe8] sm:$0xff] %v361
  %506 = vst [vmem:[#allocation2 + $0xf0] sm:$0xff] %v472
  %507 = vst [vmem:[#allocation2 + $0xf8] sm:$0xff] %v474
  %v508 = vld [vmem:[#allocation2] sm:$0xff]
  %v509 = vld [vmem:[#allocation2 + $0x8] sm:$0xff]
  %v510 = vld [vmem:[#allocation2 + $0x10] sm:$0xff]
  %v511 = vld [vmem:[#allocation2 + $0x18] sm:$0xff]
  %v512 = vld [vmem:[%s5] sm:$0xff]
  %v513 = vld [vmem:[%s5 + $0x8] sm:$0xff]
  %v514 = vld [vmem:[%s5 + $0x10] sm:$0xff]
  %v515 = vld [vmem:[%s5 + $0x18] sm:$0xff]
  %v516 = vld [vmem:[%s5 + $0x20] sm:$0xff]
  %v517 = vld [vmem:[%s5 + $0x28] sm:$0xff]
  %v518 = vld [vmem:[%s5 + $0x30] sm:$0xff]
  %v519 = vld [vmem:[%s5 + $0x38] sm:$0xff]
  %v520 = vld [vmem:[%s5 + $0x40] sm:$0xff]
  %v521 = vld [vmem:[%s5 + $0x48] sm:$0xff]
  %v522 = vld [vmem:[%s5 + $0x50] sm:$0xff]
  %v523 = vld [vmem:[%s5 + $0x58] sm:$0xff]
  %v524 = vld [vmem:[%s5 + $0x60] sm:$0xff]
  %v525 = vld [vmem:[%s5 + $0x68] sm:$0xff]
  %v526 = vld [vmem:[%s5 + $0x70] sm:$0xff]
  %v527 = vld [vmem:[%s5 + $0x78] sm:$0xff]
  %v528 = vld [vmem:[%s5 + $0x80] sm:$0xff]
  %v529 = vld [vmem:[%s5 + $0x88] sm:$0xff]
  %v530 = vld [vmem:[%s5 + $0x90] sm:$0xff]
  %v531 = vld [vmem:[%s5 + $0x98] sm:$0xff]
  %v532 = vld [vmem:[%s5 + $0xa0] sm:$0xff]
  %v533 = vld [vmem:[%s5 + $0xa8] sm:$0xff]
  %v534 = vld [vmem:[%s5 + $0xb0] sm:$0xff]
  %v535 = vld [vmem:[%s5 + $0xb8] sm:$0xff]
  %v536 = vld [vmem:[%s5 + $0xc0] sm:$0xff]
  %v537 = vld [vmem:[%s5 + $0xc8] sm:$0xff]
  %v538 = vld [vmem:[%s5 + $0xd0] sm:$0xff]
  %v539 = vld [vmem:[%s5 + $0xd8] sm:$0xff]
  %v540 = vld [vmem:[%s5 + $0xe0] sm:$0xff]
  %v541 = vld [vmem:[%s5 + $0xe8] sm:$0xff]
  %v542 = vld [vmem:[%s5 + $0xf0] sm:$0xff]
  %v543 = vld [vmem:[%s5 + $0xf8] sm:$0xff]
  %v544 = vld [vmem:[%s5 + $0x100] sm:$0xff]
  %v545 = vld [vmem:[%s5 + $0x108] sm:$0xff]
  %v546 = vld [vmem:[%s5 + $0x110] sm:$0xff]
  %v547 = vld [vmem:[%s5 + $0x118] sm:$0xff]
  %v548 = vld [vmem:[%s5 + $0x120] sm:$0xff]
  %v549 = vld [vmem:[%s5 + $0x128] sm:$0xff]
  %v550 = vld [vmem:[%s5 + $0x130] sm:$0xff]
  %v551 = vld [vmem:[%s5 + $0x138] sm:$0xff]
  %v552 = vld [vmem:[%s5 + $0x140] sm:$0xff]
  %v553 = vld [vmem:[%s5 + $0x148] sm:$0xff]
  %v554 = vld [vmem:[%s5 + $0x150] sm:$0xff]
  %v555 = vld [vmem:[%s5 + $0x158] sm:$0xff]
  %v556 = vld [vmem:[%s5 + $0x160] sm:$0xff]
  %v557 = vld [vmem:[%s5 + $0x168] sm:$0xff]
  %v558 = vld [vmem:[%s5 + $0x170] sm:$0xff]
  %v559 = vld [vmem:[%s5 + $0x178] sm:$0xff]
  %v560 = vld [vmem:[%s5 + $0x180] sm:$0xff]
  %v561 = vld [vmem:[%s5 + $0x188] sm:$0xff]
  %v562 = vld [vmem:[%s5 + $0x190] sm:$0xff]
  %v563 = vld [vmem:[%s5 + $0x198] sm:$0xff]
  %v564 = vld [vmem:[%s5 + $0x1a0] sm:$0xff]
  %v565 = vld [vmem:[%s5 + $0x1a8] sm:$0xff]
  %v566 = vld [vmem:[%s5 + $0x1b0] sm:$0xff]
  %v567 = vld [vmem:[%s5 + $0x1b8] sm:$0xff]
  %v568 = vld [vmem:[%s5 + $0x1c0] sm:$0xff]
  %v569 = vld [vmem:[%s5 + $0x1c8] sm:$0xff]
  %v570 = vld [vmem:[%s5 + $0x1d0] sm:$0xff]
  %v571 = vld [vmem:[%s5 + $0x1d8] sm:$0xff]
  %v572 = vld [vmem:[%s5 + $0x1e0] sm:$0xff]
  %v573 = vld [vmem:[%s5 + $0x1e8] sm:$0xff]
  %v574 = vld [vmem:[%s5 + $0x1f0] sm:$0xff]
  %v575 = vld [vmem:[%s5 + $0x1f8] sm:$0xff]
  %576 = vmatprep.subr.mxu0 %v573
  %577 = vmatpush1.msra.mxu0 %v572
  %578 = vmatprep.subr.mxu0 %v569
  %579 = vmatpush1.msra.mxu0 %v568
  %580 = vmatprep.subr.mxu0 %v565
  %581 = vmatpush1.msra.mxu0 %v564
  %582 = vmatprep.subr.mxu0 %v561
  %583 = vmatpush1.msra.mxu0 %v560
  %584 = vmatprep.subr.mxu0 %v557
  %585 = vmatpush1.msra.mxu0 %v556
  %586 = vmatprep.subr.mxu0 %v553
  %587 = vmatpush1.msra.mxu0 %v552
  %588 = vmatprep.subr.mxu0 %v549
  %589 = vmatpush1.msra.mxu0 %v548
  %590 = vmatprep.subr.mxu0 %v545
  %591 = vmatpush1.msra.mxu0 %v544
  %592 = vmatprep.subr.mxu0 %v541
  %593 = vmatpush1.msra.mxu0 %v540
  %594 = vmatprep.subr.mxu0 %v537
  %595 = vmatpush1.msra.mxu0 %v536
  %596 = vmatprep.subr.mxu0 %v533
  %597 = vmatpush1.msra.mxu0 %v532
  %598 = vmatprep.subr.mxu0 %v529
  %599 = vmatpush1.msra.mxu0 %v528
  %600 = vmatprep.subr.mxu0 %v525
  %601 = vmatpush1.msra.mxu0 %v524
  %602 = vmatprep.subr.mxu0 %v521
  %603 = vmatpush1.msra.mxu0 %v520
  %604 = vmatprep.subr.mxu0 %v517
  %605 = vmatpush1.msra.mxu0 %v516
  %606 = vmatprep.subr.mxu0 %v513
  %607 = vmatpush1.msra.mxu0 %v512
  %608 = vmatprep.subr.mxu0 0.0
  %609 = vmatpush2.msra.mxu0 0.0
  %610 = vmatprep.subr.mxu0 0.0
  %611 = vmatpush2.msra.mxu0 0.0
  %612 = vmatprep.subr.mxu0 0.0
  %613 = vmatpush2.msra.mxu0 0.0
  %614 = vmatprep.subr.mxu0 0.0
  %615 = vmatpush2.msra.mxu0 0.0
  %616 = vmatprep.subr.mxu0 0.0
  %617 = vmatpush2.msra.mxu0 0.0
  %618 = vmatprep.subr.mxu0 0.0
  %619 = vmatpush2.msra.mxu0 0.0
  %620 = vmatprep.subr.mxu0 0.0
  %621 = vmatpush2.msra.mxu0 0.0
  %622 = vmatprep.subr.mxu0 0.0
  %623 = vmatpush2.msra.mxu0 0.0
  %624 = vmatprep.subr.mxu0 0.0
  %625 = vmatpush2.msra.mxu0 0.0
  %626 = vmatprep.subr.mxu0 0.0
  %627 = vmatpush2.msra.mxu0 0.0
  %628 = vmatprep.subr.mxu0 0.0
  %629 = vmatpush2.msra.mxu0 0.0
  %630 = vmatprep.subr.mxu0 0.0
  %631 = vmatpush2.msra.mxu0 0.0
  %632 = vmatprep.subr.mxu0 0.0
  %633 = vmatpush2.msra.mxu0 0.0
  %634 = vmatprep.subr.mxu0 0.0
  %635 = vmatpush2.msra.mxu0 0.0
  %636 = vmatprep.subr.mxu0 0.0
  %637 = vmatpush2.msra.mxu0 0.0
  %638 = vmatprep.subr.mxu0 0.0
  %639 = vmatpush2.msra.mxu0 0.0
  %640 = vmatprep.mubr.f32.mxu0 0.0
  %641 = vmatmul.mubr.f32.gmra.mxu0 0.0
  %v642 = vpop.f32.mrf.mxu0
  %v643 = vadd.f32 0.0, %v642
  %v644 = vpop.f32.mrf.mxu0
  %v645 = vadd.f32 0.0, %v644
  %646 = vdwg.mxu0
  %647 = vmatprep.subr.mxu0 %v575
  %648 = vmatpush1.msra.mxu0 %v574
  %649 = vmatprep.subr.mxu0 %v571
  %650 = vmatpush1.msra.mxu0 %v570
  %651 = vmatprep.subr.mxu0 %v567
  %652 = vmatpush1.msra.mxu0 %v566
  %653 = vmatprep.subr.mxu0 %v563
  %654 = vmatpush1.msra.mxu0 %v562
  %655 = vmatprep.subr.mxu0 %v559
  %656 = vmatpush1.msra.mxu0 %v558
  %657 = vmatprep.subr.mxu0 %v555
  %658 = vmatpush1.msra.mxu0 %v554
  %659 = vmatprep.subr.mxu0 %v551
  %660 = vmatpush1.msra.mxu0 %v550
  %661 = vmatprep.subr.mxu0 %v547
  %662 = vmatpush1.msra.mxu0 %v546
  %663 = vmatprep.subr.mxu0 %v543
  %664 = vmatpush1.msra.mxu0 %v542
  %665 = vmatprep.subr.mxu0 %v539
  %666 = vmatpush1.msra.mxu0 %v538
  %667 = vmatprep.subr.mxu0 %v535
  %668 = vmatpush1.msra.mxu0 %v534
  %669 = vmatprep.subr.mxu0 %v531
  %670 = vmatpush1.msra.mxu0 %v530
  %671 = vmatprep.subr.mxu0 %v527
  %672 = vmatpush1.msra.mxu0 %v526
  %673 = vmatprep.subr.mxu0 %v523
  %674 = vmatpush1.msra.mxu0 %v522
  %675 = vmatprep.subr.mxu0 %v519
  %676 = vmatpush1.msra.mxu0 %v518
  %677 = vmatprep.subr.mxu0 %v515
  %678 = vmatpush1.msra.mxu0 %v514
  %679 = vmatprep.subr.mxu0 0.0
  %680 = vmatpush2.msra.mxu0 0.0
  %681 = vmatprep.subr.mxu0 0.0
  %682 = vmatpush2.msra.mxu0 0.0
  %683 = vmatprep.subr.mxu0 0.0
  %684 = vmatpush2.msra.mxu0 0.0
  %685 = vmatprep.subr.mxu0 0.0
  %686 = vmatpush2.msra.mxu0 0.0
  %687 = vmatprep.subr.mxu0 0.0
  %688 = vmatpush2.msra.mxu0 0.0
  %689 = vmatprep.subr.mxu0 0.0
  %690 = vmatpush2.msra.mxu0 0.0
  %691 = vmatprep.subr.mxu0 0.0
  %692 = vmatpush2.msra.mxu0 0.0
  %693 = vmatprep.subr.mxu0 0.0
  %694 = vmatpush2.msra.mxu0 0.0
  %695 = vmatprep.subr.mxu0 0.0
  %696 = vmatpush2.msra.mxu0 0.0
  %697 = vmatprep.subr.mxu0 0.0
  %698 = vmatpush2.msra.mxu0 0.0
  %699 = vmatprep.subr.mxu0 0.0
  %700 = vmatpush2.msra.mxu0 0.0
  %701 = vmatprep.subr.mxu0 0.0
  %702 = vmatpush2.msra.mxu0 0.0
  %703 = vmatprep.subr.mxu0 0.0
  %704 = vmatpush2.msra.mxu0 0.0
  %705 = vmatprep.subr.mxu0 0.0
  %706 = vmatpush2.msra.mxu0 0.0
  %707 = vmatprep.subr.mxu0 0.0
  %708 = vmatpush2.msra.mxu0 0.0
  %709 = vmatprep.subr.mxu0 0.0
  %710 = vmatpush2.msra.mxu0 0.0
  %711 = vmatprep.mubr.f32.mxu0 0.0
  %712 = vmatmul.mubr.f32.gmra.mxu0 0.0
  %v713 = vpop.f32.mrf.mxu0
  %v714 = vadd.f32 0.0, %v713
  %v715 = vpop.f32.mrf.mxu0
  %v716 = vadd.f32 0.0, %v715
  %717 = vdwg.mxu0
  %v718 = vadd.f32 %v508, %v643
  %v719 = vadd.f32 %v509, %v645
  %v720 = vadd.f32 %v510, %v714
  %v721 = vadd.f32 %v511, %v716
  %v722 = vxor.u32 %v718, 2147483648
  %v723 = vmul.f32 %v722, 1.442695
  %v724 = vpow.pop %v723
  %v725 = vadd.f32 %v724, 1.0
  %v726 = vrcp.pop %v725
  %v727 = vmul.f32 1.0, %v726
  %v728 = vxor.u32 %v719, 2147483648
  %v729 = vmul.f32 %v728, 1.442695
  %v730 = vpow.pop %v729
  %v731 = vadd.f32 %v730, 1.0
  %v732 = vrcp.pop %v731
  %v733 = vmul.f32 1.0, %v732
  %v734 = vtanh.pop %v720
  %v735 = vxor.u32 %v721, 2147483648
  %v736 = vmul.f32 %v735, 1.442695
  %v737 = vpow.pop %v736
  %v738 = vadd.f32 %v737, 1.0
  %v739 = vrcp.pop %v738
  %v740 = vmul.f32 1.0, %v739
  %v741 = vmul.f32 %v733, 0.0
  %v742 = vmul.f32 %v727, %v734
  %v743 = vadd.f32 %v741, %v742
  %v744 = vtanh.pop %v743
  %v745 = vmul.f32 %v740, %v744
  %v746 = vld [vmem:[%s1] sm:$0xff]
  %748 = vset.pattern.permute.xlu0 0
  %749 = vperm.xlu0 %748, %v746
  %v750 = vpop.permute.xlu0 %749
  %v752 = vmul.f32 %v745, %v750
  %v753 = vadd.f32 %v752, 0.0
  %v754 = vld [vmem:[#allocation2 + $0x20] sm:$0xff]
  %v755 = vld [vmem:[#allocation2 + $0x28] sm:$0xff]
  %v756 = vld [vmem:[#allocation2 + $0x30] sm:$0xff]
  %v757 = vld [vmem:[#allocation2 + $0x38] sm:$0xff]
  %758 = vmatprep.subr.mxu0 %v573
  %759 = vmatpush1.msra.mxu0 %v572
  %760 = vmatprep.subr.mxu0 %v569
  %761 = vmatpush1.msra.mxu0 %v568
  %762 = vmatprep.subr.mxu0 %v565
  %763 = vmatpush1.msra.mxu0 %v564
  %764 = vmatprep.subr.mxu0 %v561
  %765 = vmatpush1.msra.mxu0 %v560
  %766 = vmatprep.subr.mxu0 %v557
  %767 = vmatpush1.msra.mxu0 %v556
  %768 = vmatprep.subr.mxu0 %v553
  %769 = vmatpush1.msra.mxu0 %v552
  %770 = vmatprep.subr.mxu0 %v549
  %771 = vmatpush1.msra.mxu0 %v548
  %772 = vmatprep.subr.mxu0 %v545
  %773 = vmatpush1.msra.mxu0 %v544
  %774 = vmatprep.subr.mxu0 %v541
  %775 = vmatpush1.msra.mxu0 %v540
  %776 = vmatprep.subr.mxu0 %v537
  %777 = vmatpush1.msra.mxu0 %v536
  %778 = vmatprep.subr.mxu0 %v533
  %779 = vmatpush1.msra.mxu0 %v532
  %780 = vmatprep.subr.mxu0 %v529
  %781 = vmatpush1.msra.mxu0 %v528
  %782 = vmatprep.subr.mxu0 %v525
  %783 = vmatpush1.msra.mxu0 %v524
  %784 = vmatprep.subr.mxu0 %v521
  %785 = vmatpush1.msra.mxu0 %v520
  %786 = vmatprep.subr.mxu0 %v517
  %787 = vmatpush1.msra.mxu0 %v516
  %788 = vmatprep.subr.mxu0 %v513
  %789 = vmatpush1.msra.mxu0 %v512
  %790 = vmatprep.subr.mxu0 0.0
  %791 = vmatpush2.msra.mxu0 0.0
  %792 = vmatprep.subr.mxu0 0.0
  %793 = vmatpush2.msra.mxu0 0.0
  %794 = vmatprep.subr.mxu0 0.0
  %795 = vmatpush2.msra.mxu0 0.0
  %796 = vmatprep.subr.mxu0 0.0
  %797 = vmatpush2.msra.mxu0 0.0
  %798 = vmatprep.subr.mxu0 0.0
  %799 = vmatpush2.msra.mxu0 0.0
  %800 = vmatprep.subr.mxu0 0.0
  %801 = vmatpush2.msra.mxu0 0.0
  %802 = vmatprep.subr.mxu0 0.0
  %803 = vmatpush2.msra.mxu0 0.0
  %804 = vmatprep.subr.mxu0 0.0
  %805 = vmatpush2.msra.mxu0 0.0
  %806 = vmatprep.subr.mxu0 0.0
  %807 = vmatpush2.msra.mxu0 0.0
  %808 = vmatprep.subr.mxu0 0.0
  %809 = vmatpush2.msra.mxu0 0.0
  %810 = vmatprep.subr.mxu0 0.0
  %811 = vmatpush2.msra.mxu0 0.0
  %812 = vmatprep.subr.mxu0 0.0
  %813 = vmatpush2.msra.mxu0 0.0
  %814 = vmatprep.subr.mxu0 0.0
  %815 = vmatpush2.msra.mxu0 0.0
  %816 = vmatprep.subr.mxu0 0.0
  %817 = vmatpush2.msra.mxu0 0.0
  %818 = vmatprep.subr.mxu0 0.0
  %819 = vmatpush2.msra.mxu0 0.0
  %820 = vmatprep.subr.mxu0 0.0
  %821 = vmatpush2.msra.mxu0 0.0
  %822 = vmatprep.mubr.f32.mxu0 0.0
  %823 = vmatmul.mubr.f32.gmra.mxu0 %v745
  %v824 = vpop.f32.mrf.mxu0
  %v825 = vadd.f32 0.0, %v824
  %v826 = vpop.f32.mrf.mxu0
  %v827 = vadd.f32 0.0, %v826
  %828 = vdwg.mxu0
  %829 = vmatprep.subr.mxu0 %v575
  %830 = vmatpush1.msra.mxu0 %v574
  %831 = vmatprep.subr.mxu0 %v571
  %832 = vmatpush1.msra.mxu0 %v570
  %833 = vmatprep.subr.mxu0 %v567
  %834 = vmatpush1.msra.mxu0 %v566
  %835 = vmatprep.subr.mxu0 %v563
  %836 = vmatpush1.msra.mxu0 %v562
  %837 = vmatprep.subr.mxu0 %v559
  %838 = vmatpush1.msra.mxu0 %v558
  %839 = vmatprep.subr.mxu0 %v555
  %840 = vmatpush1.msra.mxu0 %v554
  %841 = vmatprep.subr.mxu0 %v551
  %842 = vmatpush1.msra.mxu0 %v550
  %843 = vmatprep.subr.mxu0 %v547
  %844 = vmatpush1.msra.mxu0 %v546
  %845 = vmatprep.subr.mxu0 %v543
  %846 = vmatpush1.msra.mxu0 %v542
  %847 = vmatprep.subr.mxu0 %v539
  %848 = vmatpush1.msra.mxu0 %v538
  %849 = vmatprep.subr.mxu0 %v535
  %850 = vmatpush1.msra.mxu0 %v534
  %851 = vmatprep.subr.mxu0 %v531
  %852 = vmatpush1.msra.mxu0 %v530
  %853 = vmatprep.subr.mxu0 %v527
  %854 = vmatpush1.msra.mxu0 %v526
  %855 = vmatprep.subr.mxu0 %v523
  %856 = vmatpush1.msra.mxu0 %v522
  %857 = vmatprep.subr.mxu0 %v519
  %858 = vmatpush1.msra.mxu0 %v518
  %859 = vmatprep.subr.mxu0 %v515
  %860 = vmatpush1.msra.mxu0 %v514
  %861 = vmatprep.subr.mxu0 0.0
  %862 = vmatpush2.msra.mxu0 0.0
  %863 = vmatprep.subr.mxu0 0.0
  %864 = vmatpush2.msra.mxu0 0.0
  %865 = vmatprep.subr.mxu0 0.0
  %866 = vmatpush2.msra.mxu0 0.0
  %867 = vmatprep.subr.mxu0 0.0
  %868 = vmatpush2.msra.mxu0 0.0
  %869 = vmatprep.subr.mxu0 0.0
  %870 = vmatpush2.msra.mxu0 0.0
  %871 = vmatprep.subr.mxu0 0.0
  %872 = vmatpush2.msra.mxu0 0.0
  %873 = vmatprep.subr.mxu0 0.0
  %874 = vmatpush2.msra.mxu0 0.0
  %875 = vmatprep.subr.mxu0 0.0
  %876 = vmatpush2.msra.mxu0 0.0
  %877 = vmatprep.subr.mxu0 0.0
  %878 = vmatpush2.msra.mxu0 0.0
  %879 = vmatprep.subr.mxu0 0.0
  %880 = vmatpush2.msra.mxu0 0.0
  %881 = vmatprep.subr.mxu0 0.0
  %882 = vmatpush2.msra.mxu0 0.0
  %883 = vmatprep.subr.mxu0 0.0
  %884 = vmatpush2.msra.mxu0 0.0
  %885 = vmatprep.subr.mxu0 0.0
  %886 = vmatpush2.msra.mxu0 0.0
  %887 = vmatprep.subr.mxu0 0.0
  %888 = vmatpush2.msra.mxu0 0.0
  %889 = vmatprep.subr.mxu0 0.0
  %890 = vmatpush2.msra.mxu0 0.0
  %891 = vmatprep.subr.mxu0 0.0
  %892 = vmatpush2.msra.mxu0 0.0
  %893 = vmatprep.mubr.f32.mxu0 0.0
  %894 = vmatmul.mubr.f32.gmra.mxu0 %v745
  %v895 = vpop.f32.mrf.mxu0
  %v896 = vadd.f32 0.0, %v895
  %v897 = vpop.f32.mrf.mxu0
  %v898 = vadd.f32 0.0, %v897
  %899 = vdwg.mxu0
  %v900 = vadd.f32 %v754, %v825
  %v901 = vadd.f32 %v755, %v827
  %v902 = vadd.f32 %v756, %v896
  %v903 = vadd.f32 %v757, %v898
  %v904 = vxor.u32 %v900, 2147483648
  %v905 = vmul.f32 %v904, 1.442695
  %v906 = vpow.pop %v905
  %v907 = vadd.f32 %v906, 1.0
  %v908 = vrcp.pop %v907
  %v909 = vmul.f32 1.0, %v908
  %v910 = vxor.u32 %v901, 2147483648
  %v911 = vmul.f32 %v910, 1.442695
  %v912 = vpow.pop %v911
  %v913 = vadd.f32 %v912, 1.0
  %v914 = vrcp.pop %v913
  %v915 = vmul.f32 1.0, %v914
  %v916 = vtanh.pop %v902
  %v917 = vxor.u32 %v903, 2147483648
  %v918 = vmul.f32 %v917, 1.442695
  %v919 = vpow.pop %v918
  %v920 = vadd.f32 %v919, 1.0
  %v921 = vrcp.pop %v920
  %v922 = vmul.f32 1.0, %v921
  %v923 = vmul.f32 %v915, %v743
  %v924 = vmul.f32 %v909, %v916
  %v925 = vadd.f32 %v923, %v924
  %v926 = vtanh.pop %v925
  %v927 = vmul.f32 %v922, %v926
  %v928 = vld [vmem:[%s1 + $0x8] sm:$0xff]
  %930 = vset.pattern.permute.xlu0 0
  %931 = vperm.xlu0 %930, %v928
  %v932 = vpop.permute.xlu0 %931
  %v934 = vmul.f32 %v927, %v932
  %v935 = vadd.f32 %v753, %v934
  %v936 = vld [vmem:[#allocation2 + $0x40] sm:$0xff]
  %v937 = vld [vmem:[#allocation2 + $0x48] sm:$0xff]
  %v938 = vld [vmem:[#allocation2 + $0x50] sm:$0xff]
  %v939 = vld [vmem:[#allocation2 + $0x58] sm:$0xff]
  %940 = vmatprep.subr.mxu0 %v573
  %941 = vmatpush1.msra.mxu0 %v572
  %942 = vmatprep.subr.mxu0 %v569
  %943 = vmatpush1.msra.mxu0 %v568
  %944 = vmatprep.subr.mxu0 %v565
  %945 = vmatpush1.msra.mxu0 %v564
  %946 = vmatprep.subr.mxu0 %v561
  %947 = vmatpush1.msra.mxu0 %v560
  %948 = vmatprep.subr.mxu0 %v557
  %949 = vmatpush1.msra.mxu0 %v556
  %950 = vmatprep.subr.mxu0 %v553
  %951 = vmatpush1.msra.mxu0 %v552
  %952 = vmatprep.subr.mxu0 %v549
  %953 = vmatpush1.msra.mxu0 %v548
  %954 = vmatprep.subr.mxu0 %v545
  %955 = vmatpush1.msra.mxu0 %v544
  %956 = vmatprep.subr.mxu0 %v541
  %957 = vmatpush1.msra.mxu0 %v540
  %958 = vmatprep.subr.mxu0 %v537
  %959 = vmatpush1.msra.mxu0 %v536
  %960 = vmatprep.subr.mxu0 %v533
  %961 = vmatpush1.msra.mxu0 %v532
  %962 = vmatprep.subr.mxu0 %v529
  %963 = vmatpush1.msra.mxu0 %v528
  %964 = vmatprep.subr.mxu0 %v525
  %965 = vmatpush1.msra.mxu0 %v524
  %966 = vmatprep.subr.mxu0 %v521
  %967 = vmatpush1.msra.mxu0 %v520
  %968 = vmatprep.subr.mxu0 %v517
  %969 = vmatpush1.msra.mxu0 %v516
  %970 = vmatprep.subr.mxu0 %v513
  %971 = vmatpush1.msra.mxu0 %v512
  %972 = vmatprep.subr.mxu0 0.0
  %973 = vmatpush2.msra.mxu0 0.0
  %974 = vmatprep.subr.mxu0 0.0
  %975 = vmatpush2.msra.mxu0 0.0
  %976 = vmatprep.subr.mxu0 0.0
  %977 = vmatpush2.msra.mxu0 0.0
  %978 = vmatprep.subr.mxu0 0.0
  %979 = vmatpush2.msra.mxu0 0.0
  %980 = vmatprep.subr.mxu0 0.0
  %981 = vmatpush2.msra.mxu0 0.0
  %982 = vmatprep.subr.mxu0 0.0
  %983 = vmatpush2.msra.mxu0 0.0
  %984 = vmatprep.subr.mxu0 0.0
  %985 = vmatpush2.msra.mxu0 0.0
  %986 = vmatprep.subr.mxu0 0.0
  %987 = vmatpush2.msra.mxu0 0.0
  %988 = vmatprep.subr.mxu0 0.0
  %989 = vmatpush2.msra.mxu0 0.0
  %990 = vmatprep.subr.mxu0 0.0
  %991 = vmatpush2.msra.mxu0 0.0
  %992 = vmatprep.subr.mxu0 0.0
  %993 = vmatpush2.msra.mxu0 0.0
  %994 = vmatprep.subr.mxu0 0.0
  %995 = vmatpush2.msra.mxu0 0.0
  %996 = vmatprep.subr.mxu0 0.0
  %997 = vmatpush2.msra.mxu0 0.0
  %998 = vmatprep.subr.mxu0 0.0
  %999 = vmatpush2.msra.mxu0 0.0
  %1000 = vmatprep.subr.mxu0 0.0
  %1001 = vmatpush2.msra.mxu0 0.0
  %1002 = vmatprep.subr.mxu0 0.0
  %1003 = vmatpush2.msra.mxu0 0.0
  %1004 = vmatprep.mubr.f32.mxu0 0.0
  %1005 = vmatmul.mubr.f32.gmra.mxu0 %v927
  %v1006 = vpop.f32.mrf.mxu0
  %v1007 = vadd.f32 0.0, %v1006
  %v1008 = vpop.f32.mrf.mxu0
  %v1009 = vadd.f32 0.0, %v1008
  %1010 = vdwg.mxu0
  %1011 = vmatprep.subr.mxu0 %v575
  %1012 = vmatpush1.msra.mxu0 %v574
  %1013 = vmatprep.subr.mxu0 %v571
  %1014 = vmatpush1.msra.mxu0 %v570
  %1015 = vmatprep.subr.mxu0 %v567
  %1016 = vmatpush1.msra.mxu0 %v566
  %1017 = vmatprep.subr.mxu0 %v563
  %1018 = vmatpush1.msra.mxu0 %v562
  %1019 = vmatprep.subr.mxu0 %v559
  %1020 = vmatpush1.msra.mxu0 %v558
  %1021 = vmatprep.subr.mxu0 %v555
  %1022 = vmatpush1.msra.mxu0 %v554
  %1023 = vmatprep.subr.mxu0 %v551
  %1024 = vmatpush1.msra.mxu0 %v550
  %1025 = vmatprep.subr.mxu0 %v547
  %1026 = vmatpush1.msra.mxu0 %v546
  %1027 = vmatprep.subr.mxu0 %v543
  %1028 = vmatpush1.msra.mxu0 %v542
  %1029 = vmatprep.subr.mxu0 %v539
  %1030 = vmatpush1.msra.mxu0 %v538
  %1031 = vmatprep.subr.mxu0 %v535
  %1032 = vmatpush1.msra.mxu0 %v534
  %1033 = vmatprep.subr.mxu0 %v531
  %1034 = vmatpush1.msra.mxu0 %v530
  %1035 = vmatprep.subr.mxu0 %v527
  %1036 = vmatpush1.msra.mxu0 %v526
  %1037 = vmatprep.subr.mxu0 %v523
  %1038 = vmatpush1.msra.mxu0 %v522
  %1039 = vmatprep.subr.mxu0 %v519
  %1040 = vmatpush1.msra.mxu0 %v518
  %1041 = vmatprep.subr.mxu0 %v515
  %1042 = vmatpush1.msra.mxu0 %v514
  %1043 = vmatprep.subr.mxu0 0.0
  %1044 = vmatpush2.msra.mxu0 0.0
  %1045 = vmatprep.subr.mxu0 0.0
  %1046 = vmatpush2.msra.mxu0 0.0
  %1047 = vmatprep.subr.mxu0 0.0
  %1048 = vmatpush2.msra.mxu0 0.0
  %1049 = vmatprep.subr.mxu0 0.0
  %1050 = vmatpush2.msra.mxu0 0.0
  %1051 = vmatprep.subr.mxu0 0.0
  %1052 = vmatpush2.msra.mxu0 0.0
  %1053 = vmatprep.subr.mxu0 0.0
  %1054 = vmatpush2.msra.mxu0 0.0
  %1055 = vmatprep.subr.mxu0 0.0
  %1056 = vmatpush2.msra.mxu0 0.0
  %1057 = vmatprep.subr.mxu0 0.0
  %1058 = vmatpush2.msra.mxu0 0.0
  %1059 = vmatprep.subr.mxu0 0.0
  %1060 = vmatpush2.msra.mxu0 0.0
  %1061 = vmatprep.subr.mxu0 0.0
  %1062 = vmatpush2.msra.mxu0 0.0
  %1063 = vmatprep.subr.mxu0 0.0
  %1064 = vmatpush2.msra.mxu0 0.0
  %1065 = vmatprep.subr.mxu0 0.0
  %1066 = vmatpush2.msra.mxu0 0.0
  %1067 = vmatprep.subr.mxu0 0.0
  %1068 = vmatpush2.msra.mxu0 0.0
  %1069 = vmatprep.subr.mxu0 0.0
  %1070 = vmatpush2.msra.mxu0 0.0
  %1071 = vmatprep.subr.mxu0 0.0
  %1072 = vmatpush2.msra.mxu0 0.0
  %1073 = vmatprep.subr.mxu0 0.0
  %1074 = vmatpush2.msra.mxu0 0.0
  %1075 = vmatprep.mubr.f32.mxu0 0.0
  %1076 = vmatmul.mubr.f32.gmra.mxu0 %v927
  %v1077 = vpop.f32.mrf.mxu0
  %v1078 = vadd.f32 0.0, %v1077
  %v1079 = vpop.f32.mrf.mxu0
  %v1080 = vadd.f32 0.0, %v1079
  %1081 = vdwg.mxu0
  %v1082 = vadd.f32 %v936, %v1007
  %v1083 = vadd.f32 %v937, %v1009
  %v1084 = vadd.f32 %v938, %v1078
  %v1085 = vadd.f32 %v939, %v1080
  %v1086 = vxor.u32 %v1082, 2147483648
  %v1087 = vmul.f32 %v1086, 1.442695
  %v1088 = vpow.pop %v1087
  %v1089 = vadd.f32 %v1088, 1.0
  %v1090 = vrcp.pop %v1089
  %v1091 = vmul.f32 1.0, %v1090
  %v1092 = vxor.u32 %v1083, 2147483648
  %v1093 = vmul.f32 %v1092, 1.442695
  %v1094 = vpow.pop %v1093
  %v1095 = vadd.f32 %v1094, 1.0
  %v1096 = vrcp.pop %v1095
  %v1097 = vmul.f32 1.0, %v1096
  %v1098 = vtanh.pop %v1084
  %v1099 = vxor.u32 %v1085, 2147483648
  %v1100 = vmul.f32 %v1099, 1.442695
  %v1101 = vpow.pop %v1100
  %v1102 = vadd.f32 %v1101, 1.0
  %v1103 = vrcp.pop %v1102
  %v1104 = vmul.f32 1.0, %v1103
  %v1105 = vmul.f32 %v1097, %v925
  %v1106 = vmul.f32 %v1091, %v1098
  %v1107 = vadd.f32 %v1105, %v1106
  %v1108 = vtanh.pop %v1107
  %v1109 = vmul.f32 %v1104, %v1108
  %v1110 = vld [vmem:[%s1 + $0x10] sm:$0xff]
  %1112 = vset.pattern.permute.xlu0 0
  %1113 = vperm.xlu0 %1112, %v1110
  %v1114 = vpop.permute.xlu0 %1113
  %v1116 = vmul.f32 %v1109, %v1114
  %v1117 = vadd.f32 %v935, %v1116
  %v1118 = vld [vmem:[#allocation2 + $0x60] sm:$0xff]
  %v1119 = vld [vmem:[#allocation2 + $0x68] sm:$0xff]
  %v1120 = vld [vmem:[#allocation2 + $0x70] sm:$0xff]
  %v1121 = vld [vmem:[#allocation2 + $0x78] sm:$0xff]
  %1122 = vmatprep.subr.mxu0 %v573
  %1123 = vmatpush1.msra.mxu0 %v572
  %1124 = vmatprep.subr.mxu0 %v569
  %1125 = vmatpush1.msra.mxu0 %v568
  %1126 = vmatprep.subr.mxu0 %v565
  %1127 = vmatpush1.msra.mxu0 %v564
  %1128 = vmatprep.subr.mxu0 %v561
  %1129 = vmatpush1.msra.mxu0 %v560
  %1130 = vmatprep.subr.mxu0 %v557
  %1131 = vmatpush1.msra.mxu0 %v556
  %1132 = vmatprep.subr.mxu0 %v553
  %1133 = vmatpush1.msra.mxu0 %v552
  %1134 = vmatprep.subr.mxu0 %v549
  %1135 = vmatpush1.msra.mxu0 %v548
  %1136 = vmatprep.subr.mxu0 %v545
  %1137 = vmatpush1.msra.mxu0 %v544
  %1138 = vmatprep.subr.mxu0 %v541
  %1139 = vmatpush1.msra.mxu0 %v540
  %1140 = vmatprep.subr.mxu0 %v537
  %1141 = vmatpush1.msra.mxu0 %v536
  %1142 = vmatprep.subr.mxu0 %v533
  %1143 = vmatpush1.msra.mxu0 %v532
  %1144 = vmatprep.subr.mxu0 %v529
  %1145 = vmatpush1.msra.mxu0 %v528
  %1146 = vmatprep.subr.mxu0 %v525
  %1147 = vmatpush1.msra.mxu0 %v524
  %1148 = vmatprep.subr.mxu0 %v521
  %1149 = vmatpush1.msra.mxu0 %v520
  %1150 = vmatprep.subr.mxu0 %v517
  %1151 = vmatpush1.msra.mxu0 %v516
  %1152 = vmatprep.subr.mxu0 %v513
  %1153 = vmatpush1.msra.mxu0 %v512
  %1154 = vmatprep.subr.mxu0 0.0
  %1155 = vmatpush2.msra.mxu0 0.0
  %1156 = vmatprep.subr.mxu0 0.0
  %1157 = vmatpush2.msra.mxu0 0.0
  %1158 = vmatprep.subr.mxu0 0.0
  %1159 = vmatpush2.msra.mxu0 0.0
  %1160 = vmatprep.subr.mxu0 0.0
  %1161 = vmatpush2.msra.mxu0 0.0
  %1162 = vmatprep.subr.mxu0 0.0
  %1163 = vmatpush2.msra.mxu0 0.0
  %1164 = vmatprep.subr.mxu0 0.0
  %1165 = vmatpush2.msra.mxu0 0.0
  %1166 = vmatprep.subr.mxu0 0.0
  %1167 = vmatpush2.msra.mxu0 0.0
  %1168 = vmatprep.subr.mxu0 0.0
  %1169 = vmatpush2.msra.mxu0 0.0
  %1170 = vmatprep.subr.mxu0 0.0
  %1171 = vmatpush2.msra.mxu0 0.0
  %1172 = vmatprep.subr.mxu0 0.0
  %1173 = vmatpush2.msra.mxu0 0.0
  %1174 = vmatprep.subr.mxu0 0.0
  %1175 = vmatpush2.msra.mxu0 0.0
  %1176 = vmatprep.subr.mxu0 0.0
  %1177 = vmatpush2.msra.mxu0 0.0
  %1178 = vmatprep.subr.mxu0 0.0
  %1179 = vmatpush2.msra.mxu0 0.0
  %1180 = vmatprep.subr.mxu0 0.0
  %1181 = vmatpush2.msra.mxu0 0.0
  %1182 = vmatprep.subr.mxu0 0.0
  %1183 = vmatpush2.msra.mxu0 0.0
  %1184 = vmatprep.subr.mxu0 0.0
  %1185 = vmatpush2.msra.mxu0 0.0
  %1186 = vmatprep.mubr.f32.mxu0 0.0
  %1187 = vmatmul.mubr.f32.gmra.mxu0 %v1109
  %v1188 = vpop.f32.mrf.mxu0
  %v1189 = vadd.f32 0.0, %v1188
  %v1190 = vpop.f32.mrf.mxu0
  %v1191 = vadd.f32 0.0, %v1190
  %1192 = vdwg.mxu0
  %1193 = vmatprep.subr.mxu0 %v575
  %1194 = vmatpush1.msra.mxu0 %v574
  %1195 = vmatprep.subr.mxu0 %v571
  %1196 = vmatpush1.msra.mxu0 %v570
  %1197 = vmatprep.subr.mxu0 %v567
  %1198 = vmatpush1.msra.mxu0 %v566
  %1199 = vmatprep.subr.mxu0 %v563
  %1200 = vmatpush1.msra.mxu0 %v562
  %1201 = vmatprep.subr.mxu0 %v559
  %1202 = vmatpush1.msra.mxu0 %v558
  %1203 = vmatprep.subr.mxu0 %v555
  %1204 = vmatpush1.msra.mxu0 %v554
  %1205 = vmatprep.subr.mxu0 %v551
  %1206 = vmatpush1.msra.mxu0 %v550
  %1207 = vmatprep.subr.mxu0 %v547
  %1208 = vmatpush1.msra.mxu0 %v546
  %1209 = vmatprep.subr.mxu0 %v543
  %1210 = vmatpush1.msra.mxu0 %v542
  %1211 = vmatprep.subr.mxu0 %v539
  %1212 = vmatpush1.msra.mxu0 %v538
  %1213 = vmatprep.subr.mxu0 %v535
  %1214 = vmatpush1.msra.mxu0 %v534
  %1215 = vmatprep.subr.mxu0 %v531
  %1216 = vmatpush1.msra.mxu0 %v530
  %1217 = vmatprep.subr.mxu0 %v527
  %1218 = vmatpush1.msra.mxu0 %v526
  %1219 = vmatprep.subr.mxu0 %v523
  %1220 = vmatpush1.msra.mxu0 %v522
  %1221 = vmatprep.subr.mxu0 %v519
  %1222 = vmatpush1.msra.mxu0 %v518
  %1223 = vmatprep.subr.mxu0 %v515
  %1224 = vmatpush1.msra.mxu0 %v514
  %1225 = vmatprep.subr.mxu0 0.0
  %1226 = vmatpush2.msra.mxu0 0.0
  %1227 = vmatprep.subr.mxu0 0.0
  %1228 = vmatpush2.msra.mxu0 0.0
  %1229 = vmatprep.subr.mxu0 0.0
  %1230 = vmatpush2.msra.mxu0 0.0
  %1231 = vmatprep.subr.mxu0 0.0
  %1232 = vmatpush2.msra.mxu0 0.0
  %1233 = vmatprep.subr.mxu0 0.0
  %1234 = vmatpush2.msra.mxu0 0.0
  %1235 = vmatprep.subr.mxu0 0.0
  %1236 = vmatpush2.msra.mxu0 0.0
  %1237 = vmatprep.subr.mxu0 0.0
  %1238 = vmatpush2.msra.mxu0 0.0
  %1239 = vmatprep.subr.mxu0 0.0
  %1240 = vmatpush2.msra.mxu0 0.0
  %1241 = vmatprep.subr.mxu0 0.0
  %1242 = vmatpush2.msra.mxu0 0.0
  %1243 = vmatprep.subr.mxu0 0.0
  %1244 = vmatpush2.msra.mxu0 0.0
  %1245 = vmatprep.subr.mxu0 0.0
  %1246 = vmatpush2.msra.mxu0 0.0
  %1247 = vmatprep.subr.mxu0 0.0
  %1248 = vmatpush2.msra.mxu0 0.0
  %1249 = vmatprep.subr.mxu0 0.0
  %1250 = vmatpush2.msra.mxu0 0.0
  %1251 = vmatprep.subr.mxu0 0.0
  %1252 = vmatpush2.msra.mxu0 0.0
  %1253 = vmatprep.subr.mxu0 0.0
  %1254 = vmatpush2.msra.mxu0 0.0
  %1255 = vmatprep.subr.mxu0 0.0
  %1256 = vmatpush2.msra.mxu0 0.0
  %1257 = vmatprep.mubr.f32.mxu0 0.0
  %1258 = vmatmul.mubr.f32.gmra.mxu0 %v1109
  %v1259 = vpop.f32.mrf.mxu0
  %v1260 = vadd.f32 0.0, %v1259
  %v1261 = vpop.f32.mrf.mxu0
  %v1262 = vadd.f32 0.0, %v1261
  %1263 = vdwg.mxu0
  %v1264 = vadd.f32 %v1118, %v1189
  %v1265 = vadd.f32 %v1119, %v1191
  %v1266 = vadd.f32 %v1120, %v1260
  %v1267 = vadd.f32 %v1121, %v1262
  %v1268 = vxor.u32 %v1264, 2147483648
  %v1269 = vmul.f32 %v1268, 1.442695
  %v1270 = vpow.pop %v1269
  %v1271 = vadd.f32 %v1270, 1.0
  %v1272 = vrcp.pop %v1271
  %v1273 = vmul.f32 1.0, %v1272
  %v1274 = vxor.u32 %v1265, 2147483648
  %v1275 = vmul.f32 %v1274, 1.442695
  %v1276 = vpow.pop %v1275
  %v1277 = vadd.f32 %v1276, 1.0
  %v1278 = vrcp.pop %v1277
  %v1279 = vmul.f32 1.0, %v1278
  %v1280 = vtanh.pop %v1266
  %v1281 = vxor.u32 %v1267, 2147483648
  %v1282 = vmul.f32 %v1281, 1.442695
  %v1283 = vpow.pop %v1282
  %v1284 = vadd.f32 %v1283, 1.0
  %v1285 = vrcp.pop %v1284
  %v1286 = vmul.f32 1.0, %v1285
  %v1287 = vmul.f32 %v1279, %v1107
  %v1288 = vmul.f32 %v1273, %v1280
  %v1289 = vadd.f32 %v1287, %v1288
  %v1290 = vtanh.pop %v1289
  %v1291 = vmul.f32 %v1286, %v1290
  %v1292 = vld [vmem:[%s1 + $0x18] sm:$0xff]
  %1294 = vset.pattern.permute.xlu0 0
  %1295 = vperm.xlu0 %1294, %v1292
  %v1296 = vpop.permute.xlu0 %1295
  %v1298 = vmul.f32 %v1291, %v1296
  %v1299 = vadd.f32 %v1117, %v1298
  %v1300 = vld [vmem:[#allocation2 + $0x80] sm:$0xff]
  %v1301 = vld [vmem:[#allocation2 + $0x88] sm:$0xff]
  %v1302 = vld [vmem:[#allocation2 + $0x90] sm:$0xff]
  %v1303 = vld [vmem:[#allocation2 + $0x98] sm:$0xff]
  %1304 = vmatprep.subr.mxu0 %v573
  %1305 = vmatpush1.msra.mxu0 %v572
  %1306 = vmatprep.subr.mxu0 %v569
  %1307 = vmatpush1.msra.mxu0 %v568
  %1308 = vmatprep.subr.mxu0 %v565
  %1309 = vmatpush1.msra.mxu0 %v564
  %1310 = vmatprep.subr.mxu0 %v561
  %1311 = vmatpush1.msra.mxu0 %v560
  %1312 = vmatprep.subr.mxu0 %v557
  %1313 = vmatpush1.msra.mxu0 %v556
  %1314 = vmatprep.subr.mxu0 %v553
  %1315 = vmatpush1.msra.mxu0 %v552
  %1316 = vmatprep.subr.mxu0 %v549
  %1317 = vmatpush1.msra.mxu0 %v548
  %1318 = vmatprep.subr.mxu0 %v545
  %1319 = vmatpush1.msra.mxu0 %v544
  %1320 = vmatprep.subr.mxu0 %v541
  %1321 = vmatpush1.msra.mxu0 %v540
  %1322 = vmatprep.subr.mxu0 %v537
  %1323 = vmatpush1.msra.mxu0 %v536
  %1324 = vmatprep.subr.mxu0 %v533
  %1325 = vmatpush1.msra.mxu0 %v532
  %1326 = vmatprep.subr.mxu0 %v529
  %1327 = vmatpush1.msra.mxu0 %v528
  %1328 = vmatprep.subr.mxu0 %v525
  %1329 = vmatpush1.msra.mxu0 %v524
  %1330 = vmatprep.subr.mxu0 %v521
  %1331 = vmatpush1.msra.mxu0 %v520
  %1332 = vmatprep.subr.mxu0 %v517
  %1333 = vmatpush1.msra.mxu0 %v516
  %1334 = vmatprep.subr.mxu0 %v513
  %1335 = vmatpush1.msra.mxu0 %v512
  %1336 = vmatprep.subr.mxu0 0.0
  %1337 = vmatpush2.msra.mxu0 0.0
  %1338 = vmatprep.subr.mxu0 0.0
  %1339 = vmatpush2.msra.mxu0 0.0
  %1340 = vmatprep.subr.mxu0 0.0
  %1341 = vmatpush2.msra.mxu0 0.0
  %1342 = vmatprep.subr.mxu0 0.0
  %1343 = vmatpush2.msra.mxu0 0.0
  %1344 = vmatprep.subr.mxu0 0.0
  %1345 = vmatpush2.msra.mxu0 0.0
  %1346 = vmatprep.subr.mxu0 0.0
  %1347 = vmatpush2.msra.mxu0 0.0
  %1348 = vmatprep.subr.mxu0 0.0
  %1349 = vmatpush2.msra.mxu0 0.0
  %1350 = vmatprep.subr.mxu0 0.0
  %1351 = vmatpush2.msra.mxu0 0.0
  %1352 = vmatprep.subr.mxu0 0.0
  %1353 = vmatpush2.msra.mxu0 0.0
  %1354 = vmatprep.subr.mxu0 0.0
  %1355 = vmatpush2.msra.mxu0 0.0
  %1356 = vmatprep.subr.mxu0 0.0
  %1357 = vmatpush2.msra.mxu0 0.0
  %1358 = vmatprep.subr.mxu0 0.0
  %1359 = vmatpush2.msra.mxu0 0.0
  %1360 = vmatprep.subr.mxu0 0.0
  %1361 = vmatpush2.msra.mxu0 0.0
  %1362 = vmatprep.subr.mxu0 0.0
  %1363 = vmatpush2.msra.mxu0 0.0
  %1364 = vmatprep.subr.mxu0 0.0
  %1365 = vmatpush2.msra.mxu0 0.0
  %1366 = vmatprep.subr.mxu0 0.0
  %1367 = vmatpush2.msra.mxu0 0.0
  %1368 = vmatprep.mubr.f32.mxu0 0.0
  %1369 = vmatmul.mubr.f32.gmra.mxu0 %v1291
  %v1370 = vpop.f32.mrf.mxu0
  %v1371 = vadd.f32 0.0, %v1370
  %v1372 = vpop.f32.mrf.mxu0
  %v1373 = vadd.f32 0.0, %v1372
  %1374 = vdwg.mxu0
  %1375 = vmatprep.subr.mxu0 %v575
  %1376 = vmatpush1.msra.mxu0 %v574
  %1377 = vmatprep.subr.mxu0 %v571
  %1378 = vmatpush1.msra.mxu0 %v570
  %1379 = vmatprep.subr.mxu0 %v567
  %1380 = vmatpush1.msra.mxu0 %v566
  %1381 = vmatprep.subr.mxu0 %v563
  %1382 = vmatpush1.msra.mxu0 %v562
  %1383 = vmatprep.subr.mxu0 %v559
  %1384 = vmatpush1.msra.mxu0 %v558
  %1385 = vmatprep.subr.mxu0 %v555
  %1386 = vmatpush1.msra.mxu0 %v554
  %1387 = vmatprep.subr.mxu0 %v551
  %1388 = vmatpush1.msra.mxu0 %v550
  %1389 = vmatprep.subr.mxu0 %v547
  %1390 = vmatpush1.msra.mxu0 %v546
  %1391 = vmatprep.subr.mxu0 %v543
  %1392 = vmatpush1.msra.mxu0 %v542
  %1393 = vmatprep.subr.mxu0 %v539
  %1394 = vmatpush1.msra.mxu0 %v538
  %1395 = vmatprep.subr.mxu0 %v535
  %1396 = vmatpush1.msra.mxu0 %v534
  %1397 = vmatprep.subr.mxu0 %v531
  %1398 = vmatpush1.msra.mxu0 %v530
  %1399 = vmatprep.subr.mxu0 %v527
  %1400 = vmatpush1.msra.mxu0 %v526
  %1401 = vmatprep.subr.mxu0 %v523
  %1402 = vmatpush1.msra.mxu0 %v522
  %1403 = vmatprep.subr.mxu0 %v519
  %1404 = vmatpush1.msra.mxu0 %v518
  %1405 = vmatprep.subr.mxu0 %v515
  %1406 = vmatpush1.msra.mxu0 %v514
  %1407 = vmatprep.subr.mxu0 0.0
  %1408 = vmatpush2.msra.mxu0 0.0
  %1409 = vmatprep.subr.mxu0 0.0
  %1410 = vmatpush2.msra.mxu0 0.0
  %1411 = vmatprep.subr.mxu0 0.0
  %1412 = vmatpush2.msra.mxu0 0.0
  %1413 = vmatprep.subr.mxu0 0.0
  %1414 = vmatpush2.msra.mxu0 0.0
  %1415 = vmatprep.subr.mxu0 0.0
  %1416 = vmatpush2.msra.mxu0 0.0
  %1417 = vmatprep.subr.mxu0 0.0
  %1418 = vmatpush2.msra.mxu0 0.0
  %1419 = vmatprep.subr.mxu0 0.0
  %1420 = vmatpush2.msra.mxu0 0.0
  %1421 = vmatprep.subr.mxu0 0.0
  %1422 = vmatpush2.msra.mxu0 0.0
  %1423 = vmatprep.subr.mxu0 0.0
  %1424 = vmatpush2.msra.mxu0 0.0
  %1425 = vmatprep.subr.mxu0 0.0
  %1426 = vmatpush2.msra.mxu0 0.0
  %1427 = vmatprep.subr.mxu0 0.0
  %1428 = vmatpush2.msra.mxu0 0.0
  %1429 = vmatprep.subr.mxu0 0.0
  %1430 = vmatpush2.msra.mxu0 0.0
  %1431 = vmatprep.subr.mxu0 0.0
  %1432 = vmatpush2.msra.mxu0 0.0
  %1433 = vmatprep.subr.mxu0 0.0
  %1434 = vmatpush2.msra.mxu0 0.0
  %1435 = vmatprep.subr.mxu0 0.0
  %1436 = vmatpush2.msra.mxu0 0.0
  %1437 = vmatprep.subr.mxu0 0.0
  %1438 = vmatpush2.msra.mxu0 0.0
  %1439 = vmatprep.mubr.f32.mxu0 0.0
  %1440 = vmatmul.mubr.f32.gmra.mxu0 %v1291
  %v1441 = vpop.f32.mrf.mxu0
  %v1442 = vadd.f32 0.0, %v1441
  %v1443 = vpop.f32.mrf.mxu0
  %v1444 = vadd.f32 0.0, %v1443
  %1445 = vdwg.mxu0
  %v1446 = vadd.f32 %v1300, %v1371
  %v1447 = vadd.f32 %v1301, %v1373
  %v1448 = vadd.f32 %v1302, %v1442
  %v1449 = vadd.f32 %v1303, %v1444
  %v1450 = vxor.u32 %v1446, 2147483648
  %v1451 = vmul.f32 %v1450, 1.442695
  %v1452 = vpow.pop %v1451
  %v1453 = vadd.f32 %v1452, 1.0
  %v1454 = vrcp.pop %v1453
  %v1455 = vmul.f32 1.0, %v1454
  %v1456 = vxor.u32 %v1447, 2147483648
  %v1457 = vmul.f32 %v1456, 1.442695
  %v1458 = vpow.pop %v1457
  %v1459 = vadd.f32 %v1458, 1.0
  %v1460 = vrcp.pop %v1459
  %v1461 = vmul.f32 1.0, %v1460
  %v1462 = vtanh.pop %v1448
  %v1463 = vxor.u32 %v1449, 2147483648
  %v1464 = vmul.f32 %v1463, 1.442695
  %v1465 = vpow.pop %v1464
  %v1466 = vadd.f32 %v1465, 1.0
  %v1467 = vrcp.pop %v1466
  %v1468 = vmul.f32 1.0, %v1467
  %v1469 = vmul.f32 %v1461, %v1289
  %v1470 = vmul.f32 %v1455, %v1462
  %v1471 = vadd.f32 %v1469, %v1470
  %v1472 = vtanh.pop %v1471
  %v1473 = vmul.f32 %v1468, %v1472
  %v1474 = vld [vmem:[%s1 + $0x20] sm:$0xff]
  %1476 = vset.pattern.permute.xlu0 0
  %1477 = vperm.xlu0 %1476, %v1474
  %v1478 = vpop.permute.xlu0 %1477
  %v1480 = vmul.f32 %v1473, %v1478
  %v1481 = vadd.f32 %v1299, %v1480
  %v1482 = vld [vmem:[#allocation2 + $0xa0] sm:$0xff]
  %v1483 = vld [vmem:[#allocation2 + $0xa8] sm:$0xff]
  %v1484 = vld [vmem:[#allocation2 + $0xb0] sm:$0xff]
  %v1485 = vld [vmem:[#allocation2 + $0xb8] sm:$0xff]
  %1486 = vmatprep.subr.mxu0 %v573
  %1487 = vmatpush1.msra.mxu0 %v572
  %1488 = vmatprep.subr.mxu0 %v569
  %1489 = vmatpush1.msra.mxu0 %v568
  %1490 = vmatprep.subr.mxu0 %v565
  %1491 = vmatpush1.msra.mxu0 %v564
  %1492 = vmatprep.subr.mxu0 %v561
  %1493 = vmatpush1.msra.mxu0 %v560
  %1494 = vmatprep.subr.mxu0 %v557
  %1495 = vmatpush1.msra.mxu0 %v556
  %1496 = vmatprep.subr.mxu0 %v553
  %1497 = vmatpush1.msra.mxu0 %v552
  %1498 = vmatprep.subr.mxu0 %v549
  %1499 = vmatpush1.msra.mxu0 %v548
  %1500 = vmatprep.subr.mxu0 %v545
  %1501 = vmatpush1.msra.mxu0 %v544
  %1502 = vmatprep.subr.mxu0 %v541
  %1503 = vmatpush1.msra.mxu0 %v540
  %1504 = vmatprep.subr.mxu0 %v537
  %1505 = vmatpush1.msra.mxu0 %v536
  %1506 = vmatprep.subr.mxu0 %v533
  %1507 = vmatpush1.msra.mxu0 %v532
  %1508 = vmatprep.subr.mxu0 %v529
  %1509 = vmatpush1.msra.mxu0 %v528
  %1510 = vmatprep.subr.mxu0 %v525
  %1511 = vmatpush1.msra.mxu0 %v524
  %1512 = vmatprep.subr.mxu0 %v521
  %1513 = vmatpush1.msra.mxu0 %v520
  %1514 = vmatprep.subr.mxu0 %v517
  %1515 = vmatpush1.msra.mxu0 %v516
  %1516 = vmatprep.subr.mxu0 %v513
  %1517 = vmatpush1.msra.mxu0 %v512
  %1518 = vmatprep.subr.mxu0 0.0
  %1519 = vmatpush2.msra.mxu0 0.0
  %1520 = vmatprep.subr.mxu0 0.0
  %1521 = vmatpush2.msra.mxu0 0.0
  %1522 = vmatprep.subr.mxu0 0.0
  %1523 = vmatpush2.msra.mxu0 0.0
  %1524 = vmatprep.subr.mxu0 0.0
  %1525 = vmatpush2.msra.mxu0 0.0
  %1526 = vmatprep.subr.mxu0 0.0
  %1527 = vmatpush2.msra.mxu0 0.0
  %1528 = vmatprep.subr.mxu0 0.0
  %1529 = vmatpush2.msra.mxu0 0.0
  %1530 = vmatprep.subr.mxu0 0.0
  %1531 = vmatpush2.msra.mxu0 0.0
  %1532 = vmatprep.subr.mxu0 0.0
  %1533 = vmatpush2.msra.mxu0 0.0
  %1534 = vmatprep.subr.mxu0 0.0
  %1535 = vmatpush2.msra.mxu0 0.0
  %1536 = vmatprep.subr.mxu0 0.0
  %1537 = vmatpush2.msra.mxu0 0.0
  %1538 = vmatprep.subr.mxu0 0.0
  %1539 = vmatpush2.msra.mxu0 0.0
  %1540 = vmatprep.subr.mxu0 0.0
  %1541 = vmatpush2.msra.mxu0 0.0
  %1542 = vmatprep.subr.mxu0 0.0
  %1543 = vmatpush2.msra.mxu0 0.0
  %1544 = vmatprep.subr.mxu0 0.0
  %1545 = vmatpush2.msra.mxu0 0.0
  %1546 = vmatprep.subr.mxu0 0.0
  %1547 = vmatpush2.msra.mxu0 0.0
  %1548 = vmatprep.subr.mxu0 0.0
  %1549 = vmatpush2.msra.mxu0 0.0
  %1550 = vmatprep.mubr.f32.mxu0 0.0
  %1551 = vmatmul.mubr.f32.gmra.mxu0 %v1473
  %v1552 = vpop.f32.mrf.mxu0
  %v1553 = vadd.f32 0.0, %v1552
  %v1554 = vpop.f32.mrf.mxu0
  %v1555 = vadd.f32 0.0, %v1554
  %1556 = vdwg.mxu0
  %1557 = vmatprep.subr.mxu0 %v575
  %1558 = vmatpush1.msra.mxu0 %v574
  %1559 = vmatprep.subr.mxu0 %v571
  %1560 = vmatpush1.msra.mxu0 %v570
  %1561 = vmatprep.subr.mxu0 %v567
  %1562 = vmatpush1.msra.mxu0 %v566
  %1563 = vmatprep.subr.mxu0 %v563
  %1564 = vmatpush1.msra.mxu0 %v562
  %1565 = vmatprep.subr.mxu0 %v559
  %1566 = vmatpush1.msra.mxu0 %v558
  %1567 = vmatprep.subr.mxu0 %v555
  %1568 = vmatpush1.msra.mxu0 %v554
  %1569 = vmatprep.subr.mxu0 %v551
  %1570 = vmatpush1.msra.mxu0 %v550
  %1571 = vmatprep.subr.mxu0 %v547
  %1572 = vmatpush1.msra.mxu0 %v546
  %1573 = vmatprep.subr.mxu0 %v543
  %1574 = vmatpush1.msra.mxu0 %v542
  %1575 = vmatprep.subr.mxu0 %v539
  %1576 = vmatpush1.msra.mxu0 %v538
  %1577 = vmatprep.subr.mxu0 %v535
  %1578 = vmatpush1.msra.mxu0 %v534
  %1579 = vmatprep.subr.mxu0 %v531
  %1580 = vmatpush1.msra.mxu0 %v530
  %1581 = vmatprep.subr.mxu0 %v527
  %1582 = vmatpush1.msra.mxu0 %v526
  %1583 = vmatprep.subr.mxu0 %v523
  %1584 = vmatpush1.msra.mxu0 %v522
  %1585 = vmatprep.subr.mxu0 %v519
  %1586 = vmatpush1.msra.mxu0 %v518
  %1587 = vmatprep.subr.mxu0 %v515
  %1588 = vmatpush1.msra.mxu0 %v514
  %1589 = vmatprep.subr.mxu0 0.0
  %1590 = vmatpush2.msra.mxu0 0.0
  %1591 = vmatprep.subr.mxu0 0.0
  %1592 = vmatpush2.msra.mxu0 0.0
  %1593 = vmatprep.subr.mxu0 0.0
  %1594 = vmatpush2.msra.mxu0 0.0
  %1595 = vmatprep.subr.mxu0 0.0
  %1596 = vmatpush2.msra.mxu0 0.0
  %1597 = vmatprep.subr.mxu0 0.0
  %1598 = vmatpush2.msra.mxu0 0.0
  %1599 = vmatprep.subr.mxu0 0.0
  %1600 = vmatpush2.msra.mxu0 0.0
  %1601 = vmatprep.subr.mxu0 0.0
  %1602 = vmatpush2.msra.mxu0 0.0
  %1603 = vmatprep.subr.mxu0 0.0
  %1604 = vmatpush2.msra.mxu0 0.0
  %1605 = vmatprep.subr.mxu0 0.0
  %1606 = vmatpush2.msra.mxu0 0.0
  %1607 = vmatprep.subr.mxu0 0.0
  %1608 = vmatpush2.msra.mxu0 0.0
  %1609 = vmatprep.subr.mxu0 0.0
  %1610 = vmatpush2.msra.mxu0 0.0
  %1611 = vmatprep.subr.mxu0 0.0
  %1612 = vmatpush2.msra.mxu0 0.0
  %1613 = vmatprep.subr.mxu0 0.0
  %1614 = vmatpush2.msra.mxu0 0.0
  %1615 = vmatprep.subr.mxu0 0.0
  %1616 = vmatpush2.msra.mxu0 0.0
  %1617 = vmatprep.subr.mxu0 0.0
  %1618 = vmatpush2.msra.mxu0 0.0
  %1619 = vmatprep.subr.mxu0 0.0
  %1620 = vmatpush2.msra.mxu0 0.0
  %1621 = vmatprep.mubr.f32.mxu0 0.0
  %1622 = vmatmul.mubr.f32.gmra.mxu0 %v1473
  %v1623 = vpop.f32.mrf.mxu0
  %v1624 = vadd.f32 0.0, %v1623
  %v1625 = vpop.f32.mrf.mxu0
  %v1626 = vadd.f32 0.0, %v1625
  %1627 = vdwg.mxu0
  %v1628 = vadd.f32 %v1482, %v1553
  %v1629 = vadd.f32 %v1483, %v1555
  %v1630 = vadd.f32 %v1484, %v1624
  %v1631 = vadd.f32 %v1485, %v1626
  %v1632 = vxor.u32 %v1628, 2147483648
  %v1633 = vmul.f32 %v1632, 1.442695
  %v1634 = vpow.pop %v1633
  %v1635 = vadd.f32 %v1634, 1.0
  %v1636 = vrcp.pop %v1635
  %v1637 = vmul.f32 1.0, %v1636
  %v1638 = vxor.u32 %v1629, 2147483648
  %v1639 = vmul.f32 %v1638, 1.442695
  %v1640 = vpow.pop %v1639
  %v1641 = vadd.f32 %v1640, 1.0
  %v1642 = vrcp.pop %v1641
  %v1643 = vmul.f32 1.0, %v1642
  %v1644 = vtanh.pop %v1630
  %v1645 = vxor.u32 %v1631, 2147483648
  %v1646 = vmul.f32 %v1645, 1.442695
  %v1647 = vpow.pop %v1646
  %v1648 = vadd.f32 %v1647, 1.0
  %v1649 = vrcp.pop %v1648
  %v1650 = vmul.f32 1.0, %v1649
  %v1651 = vmul.f32 %v1643, %v1471
  %v1652 = vmul.f32 %v1637, %v1644
  %v1653 = vadd.f32 %v1651, %v1652
  %v1654 = vtanh.pop %v1653
  %v1655 = vmul.f32 %v1650, %v1654
  %v1656 = vld [vmem:[%s1 + $0x28] sm:$0xff]
  %1658 = vset.pattern.permute.xlu0 0
  %1659 = vperm.xlu0 %1658, %v1656
  %v1660 = vpop.permute.xlu0 %1659
  %v1662 = vmul.f32 %v1655, %v1660
  %v1663 = vadd.f32 %v1481, %v1662
  %v1664 = vld [vmem:[#allocation2 + $0xc0] sm:$0xff]
  %v1665 = vld [vmem:[#allocation2 + $0xc8] sm:$0xff]
  %v1666 = vld [vmem:[#allocation2 + $0xd0] sm:$0xff]
  %v1667 = vld [vmem:[#allocation2 + $0xd8] sm:$0xff]
  %1668 = vmatprep.subr.mxu0 %v573
  %1669 = vmatpush1.msra.mxu0 %v572
  %1670 = vmatprep.subr.mxu0 %v569
  %1671 = vmatpush1.msra.mxu0 %v568
  %1672 = vmatprep.subr.mxu0 %v565
  %1673 = vmatpush1.msra.mxu0 %v564
  %1674 = vmatprep.subr.mxu0 %v561
  %1675 = vmatpush1.msra.mxu0 %v560
  %1676 = vmatprep.subr.mxu0 %v557
  %1677 = vmatpush1.msra.mxu0 %v556
  %1678 = vmatprep.subr.mxu0 %v553
  %1679 = vmatpush1.msra.mxu0 %v552
  %1680 = vmatprep.subr.mxu0 %v549
  %1681 = vmatpush1.msra.mxu0 %v548
  %1682 = vmatprep.subr.mxu0 %v545
  %1683 = vmatpush1.msra.mxu0 %v544
  %1684 = vmatprep.subr.mxu0 %v541
  %1685 = vmatpush1.msra.mxu0 %v540
  %1686 = vmatprep.subr.mxu0 %v537
  %1687 = vmatpush1.msra.mxu0 %v536
  %1688 = vmatprep.subr.mxu0 %v533
  %1689 = vmatpush1.msra.mxu0 %v532
  %1690 = vmatprep.subr.mxu0 %v529
  %1691 = vmatpush1.msra.mxu0 %v528
  %1692 = vmatprep.subr.mxu0 %v525
  %1693 = vmatpush1.msra.mxu0 %v524
  %1694 = vmatprep.subr.mxu0 %v521
  %1695 = vmatpush1.msra.mxu0 %v520
  %1696 = vmatprep.subr.mxu0 %v517
  %1697 = vmatpush1.msra.mxu0 %v516
  %1698 = vmatprep.subr.mxu0 %v513
  %1699 = vmatpush1.msra.mxu0 %v512
  %1700 = vmatprep.subr.mxu0 0.0
  %1701 = vmatpush2.msra.mxu0 0.0
  %1702 = vmatprep.subr.mxu0 0.0
  %1703 = vmatpush2.msra.mxu0 0.0
  %1704 = vmatprep.subr.mxu0 0.0
  %1705 = vmatpush2.msra.mxu0 0.0
  %1706 = vmatprep.subr.mxu0 0.0
  %1707 = vmatpush2.msra.mxu0 0.0
  %1708 = vmatprep.subr.mxu0 0.0
  %1709 = vmatpush2.msra.mxu0 0.0
  %1710 = vmatprep.subr.mxu0 0.0
  %1711 = vmatpush2.msra.mxu0 0.0
  %1712 = vmatprep.subr.mxu0 0.0
  %1713 = vmatpush2.msra.mxu0 0.0
  %1714 = vmatprep.subr.mxu0 0.0
  %1715 = vmatpush2.msra.mxu0 0.0
  %1716 = vmatprep.subr.mxu0 0.0
  %1717 = vmatpush2.msra.mxu0 0.0
  %1718 = vmatprep.subr.mxu0 0.0
  %1719 = vmatpush2.msra.mxu0 0.0
  %1720 = vmatprep.subr.mxu0 0.0
  %1721 = vmatpush2.msra.mxu0 0.0
  %1722 = vmatprep.subr.mxu0 0.0
  %1723 = vmatpush2.msra.mxu0 0.0
  %1724 = vmatprep.subr.mxu0 0.0
  %1725 = vmatpush2.msra.mxu0 0.0
  %1726 = vmatprep.subr.mxu0 0.0
  %1727 = vmatpush2.msra.mxu0 0.0
  %1728 = vmatprep.subr.mxu0 0.0
  %1729 = vmatpush2.msra.mxu0 0.0
  %1730 = vmatprep.subr.mxu0 0.0
  %1731 = vmatpush2.msra.mxu0 0.0
  %1732 = vmatprep.mubr.f32.mxu0 0.0
  %1733 = vmatmul.mubr.f32.gmra.mxu0 %v1655
  %v1734 = vpop.f32.mrf.mxu0
  %v1735 = vadd.f32 0.0, %v1734
  %v1736 = vpop.f32.mrf.mxu0
  %v1737 = vadd.f32 0.0, %v1736
  %1738 = vdwg.mxu0
  %1739 = vmatprep.subr.mxu0 %v575
  %1740 = vmatpush1.msra.mxu0 %v574
  %1741 = vmatprep.subr.mxu0 %v571
  %1742 = vmatpush1.msra.mxu0 %v570
  %1743 = vmatprep.subr.mxu0 %v567
  %1744 = vmatpush1.msra.mxu0 %v566
  %1745 = vmatprep.subr.mxu0 %v563
  %1746 = vmatpush1.msra.mxu0 %v562
  %1747 = vmatprep.subr.mxu0 %v559
  %1748 = vmatpush1.msra.mxu0 %v558
  %1749 = vmatprep.subr.mxu0 %v555
  %1750 = vmatpush1.msra.mxu0 %v554
  %1751 = vmatprep.subr.mxu0 %v551
  %1752 = vmatpush1.msra.mxu0 %v550
  %1753 = vmatprep.subr.mxu0 %v547
  %1754 = vmatpush1.msra.mxu0 %v546
  %1755 = vmatprep.subr.mxu0 %v543
  %1756 = vmatpush1.msra.mxu0 %v542
  %1757 = vmatprep.subr.mxu0 %v539
  %1758 = vmatpush1.msra.mxu0 %v538
  %1759 = vmatprep.subr.mxu0 %v535
  %1760 = vmatpush1.msra.mxu0 %v534
  %1761 = vmatprep.subr.mxu0 %v531
  %1762 = vmatpush1.msra.mxu0 %v530
  %1763 = vmatprep.subr.mxu0 %v527
  %1764 = vmatpush1.msra.mxu0 %v526
  %1765 = vmatprep.subr.mxu0 %v523
  %1766 = vmatpush1.msra.mxu0 %v522
  %1767 = vmatprep.subr.mxu0 %v519
  %1768 = vmatpush1.msra.mxu0 %v518
  %1769 = vmatprep.subr.mxu0 %v515
  %1770 = vmatpush1.msra.mxu0 %v514
  %1771 = vmatprep.subr.mxu0 0.0
  %1772 = vmatpush2.msra.mxu0 0.0
  %1773 = vmatprep.subr.mxu0 0.0
  %1774 = vmatpush2.msra.mxu0 0.0
  %1775 = vmatprep.subr.mxu0 0.0
  %1776 = vmatpush2.msra.mxu0 0.0
  %1777 = vmatprep.subr.mxu0 0.0
  %1778 = vmatpush2.msra.mxu0 0.0
  %1779 = vmatprep.subr.mxu0 0.0
  %1780 = vmatpush2.msra.mxu0 0.0
  %1781 = vmatprep.subr.mxu0 0.0
  %1782 = vmatpush2.msra.mxu0 0.0
  %1783 = vmatprep.subr.mxu0 0.0
  %1784 = vmatpush2.msra.mxu0 0.0
  %1785 = vmatprep.subr.mxu0 0.0
  %1786 = vmatpush2.msra.mxu0 0.0
  %1787 = vmatprep.subr.mxu0 0.0
  %1788 = vmatpush2.msra.mxu0 0.0
  %1789 = vmatprep.subr.mxu0 0.0
  %1790 = vmatpush2.msra.mxu0 0.0
  %1791 = vmatprep.subr.mxu0 0.0
  %1792 = vmatpush2.msra.mxu0 0.0
  %1793 = vmatprep.subr.mxu0 0.0
  %1794 = vmatpush2.msra.mxu0 0.0
  %1795 = vmatprep.subr.mxu0 0.0
  %1796 = vmatpush2.msra.mxu0 0.0
  %1797 = vmatprep.subr.mxu0 0.0
  %1798 = vmatpush2.msra.mxu0 0.0
  %1799 = vmatprep.subr.mxu0 0.0
  %1800 = vmatpush2.msra.mxu0 0.0
  %1801 = vmatprep.subr.mxu0 0.0
  %1802 = vmatpush2.msra.mxu0 0.0
  %1803 = vmatprep.mubr.f32.mxu0 0.0
  %1804 = vmatmul.mubr.f32.gmra.mxu0 %v1655
  %v1805 = vpop.f32.mrf.mxu0
  %v1806 = vadd.f32 0.0, %v1805
  %v1807 = vpop.f32.mrf.mxu0
  %v1808 = vadd.f32 0.0, %v1807
  %1809 = vdwg.mxu0
  %v1810 = vadd.f32 %v1664, %v1735
  %v1811 = vadd.f32 %v1665, %v1737
  %v1812 = vadd.f32 %v1666, %v1806
  %v1813 = vadd.f32 %v1667, %v1808
  %v1814 = vxor.u32 %v1810, 2147483648
  %v1815 = vmul.f32 %v1814, 1.442695
  %v1816 = vpow.pop %v1815
  %v1817 = vadd.f32 %v1816, 1.0
  %v1818 = vrcp.pop %v1817
  %v1819 = vmul.f32 1.0, %v1818
  %v1820 = vxor.u32 %v1811, 2147483648
  %v1821 = vmul.f32 %v1820, 1.442695
  %v1822 = vpow.pop %v1821
  %v1823 = vadd.f32 %v1822, 1.0
  %v1824 = vrcp.pop %v1823
  %v1825 = vmul.f32 1.0, %v1824
  %v1826 = vtanh.pop %v1812
  %v1827 = vxor.u32 %v1813, 2147483648
  %v1828 = vmul.f32 %v1827, 1.442695
  %v1829 = vpow.pop %v1828
  %v1830 = vadd.f32 %v1829, 1.0
  %v1831 = vrcp.pop %v1830
  %v1832 = vmul.f32 1.0, %v1831
  %v1833 = vmul.f32 %v1825, %v1653
  %v1834 = vmul.f32 %v1819, %v1826
  %v1835 = vadd.f32 %v1833, %v1834
  %v1836 = vtanh.pop %v1835
  %v1837 = vmul.f32 %v1832, %v1836
  %v1838 = vld [vmem:[%s1 + $0x30] sm:$0xff]
  %1840 = vset.pattern.permute.xlu0 0
  %1841 = vperm.xlu0 %1840, %v1838
  %v1842 = vpop.permute.xlu0 %1841
  %v1844 = vmul.f32 %v1837, %v1842
  %v1845 = vadd.f32 %v1663, %v1844
  %v1846 = vld [vmem:[#allocation2 + $0xe0] sm:$0xff]
  %v1847 = vld [vmem:[#allocation2 + $0xe8] sm:$0xff]
  %v1848 = vld [vmem:[#allocation2 + $0xf0] sm:$0xff]
  %v1849 = vld [vmem:[#allocation2 + $0xf8] sm:$0xff]
  %1850 = vmatprep.subr.mxu0 %v573
  %1851 = vmatpush1.msra.mxu0 %v572
  %1852 = vmatprep.subr.mxu0 %v569
  %1853 = vmatpush1.msra.mxu0 %v568
  %1854 = vmatprep.subr.mxu0 %v565
  %1855 = vmatpush1.msra.mxu0 %v564
  %1856 = vmatprep.subr.mxu0 %v561
  %1857 = vmatpush1.msra.mxu0 %v560
  %1858 = vmatprep.subr.mxu0 %v557
  %1859 = vmatpush1.msra.mxu0 %v556
  %1860 = vmatprep.subr.mxu0 %v553
  %1861 = vmatpush1.msra.mxu0 %v552
  %1862 = vmatprep.subr.mxu0 %v549
  %1863 = vmatpush1.msra.mxu0 %v548
  %1864 = vmatprep.subr.mxu0 %v545
  %1865 = vmatpush1.msra.mxu0 %v544
  %1866 = vmatprep.subr.mxu0 %v541
  %1867 = vmatpush1.msra.mxu0 %v540
  %1868 = vmatprep.subr.mxu0 %v537
  %1869 = vmatpush1.msra.mxu0 %v536
  %1870 = vmatprep.subr.mxu0 %v533
  %1871 = vmatpush1.msra.mxu0 %v532
  %1872 = vmatprep.subr.mxu0 %v529
  %1873 = vmatpush1.msra.mxu0 %v528
  %1874 = vmatprep.subr.mxu0 %v525
  %1875 = vmatpush1.msra.mxu0 %v524
  %1876 = vmatprep.subr.mxu0 %v521
  %1877 = vmatpush1.msra.mxu0 %v520
  %1878 = vmatprep.subr.mxu0 %v517
  %1879 = vmatpush1.msra.mxu0 %v516
  %1880 = vmatprep.subr.mxu0 %v513
  %1881 = vmatpush1.msra.mxu0 %v512
  %1882 = vmatprep.subr.mxu0 0.0
  %1883 = vmatpush2.msra.mxu0 0.0
  %1884 = vmatprep.subr.mxu0 0.0
  %1885 = vmatpush2.msra.mxu0 0.0
  %1886 = vmatprep.subr.mxu0 0.0
  %1887 = vmatpush2.msra.mxu0 0.0
  %1888 = vmatprep.subr.mxu0 0.0
  %1889 = vmatpush2.msra.mxu0 0.0
  %1890 = vmatprep.subr.mxu0 0.0
  %1891 = vmatpush2.msra.mxu0 0.0
  %1892 = vmatprep.subr.mxu0 0.0
  %1893 = vmatpush2.msra.mxu0 0.0
  %1894 = vmatprep.subr.mxu0 0.0
  %1895 = vmatpush2.msra.mxu0 0.0
  %1896 = vmatprep.subr.mxu0 0.0
  %1897 = vmatpush2.msra.mxu0 0.0
  %1898 = vmatprep.subr.mxu0 0.0
  %1899 = vmatpush2.msra.mxu0 0.0
  %1900 = vmatprep.subr.mxu0 0.0
  %1901 = vmatpush2.msra.mxu0 0.0
  %1902 = vmatprep.subr.mxu0 0.0
  %1903 = vmatpush2.msra.mxu0 0.0
  %1904 = vmatprep.subr.mxu0 0.0
  %1905 = vmatpush2.msra.mxu0 0.0
  %1906 = vmatprep.subr.mxu0 0.0
  %1907 = vmatpush2.msra.mxu0 0.0
  %1908 = vmatprep.subr.mxu0 0.0
  %1909 = vmatpush2.msra.mxu0 0.0
  %1910 = vmatprep.subr.mxu0 0.0
  %1911 = vmatpush2.msra.mxu0 0.0
  %1912 = vmatprep.subr.mxu0 0.0
  %1913 = vmatpush2.msra.mxu0 0.0
  %1914 = vmatprep.mubr.f32.mxu0 0.0
  %1915 = vmatmul.mubr.f32.gmra.mxu0 %v1837
  %v1916 = vpop.f32.mrf.mxu0
  %v1917 = vadd.f32 0.0, %v1916
  %v1918 = vpop.f32.mrf.mxu0
  %v1919 = vadd.f32 0.0, %v1918
  %1920 = vdwg.mxu0
  %1921 = vmatprep.subr.mxu0 %v575
  %1922 = vmatpush1.msra.mxu0 %v574
  %1923 = vmatprep.subr.mxu0 %v571
  %1924 = vmatpush1.msra.mxu0 %v570
  %1925 = vmatprep.subr.mxu0 %v567
  %1926 = vmatpush1.msra.mxu0 %v566
  %1927 = vmatprep.subr.mxu0 %v563
  %1928 = vmatpush1.msra.mxu0 %v562
  %1929 = vmatprep.subr.mxu0 %v559
  %1930 = vmatpush1.msra.mxu0 %v558
  %1931 = vmatprep.subr.mxu0 %v555
  %1932 = vmatpush1.msra.mxu0 %v554
  %1933 = vmatprep.subr.mxu0 %v551
  %1934 = vmatpush1.msra.mxu0 %v550
  %1935 = vmatprep.subr.mxu0 %v547
  %1936 = vmatpush1.msra.mxu0 %v546
  %1937 = vmatprep.subr.mxu0 %v543
  %1938 = vmatpush1.msra.mxu0 %v542
  %1939 = vmatprep.subr.mxu0 %v539
  %1940 = vmatpush1.msra.mxu0 %v538
  %1941 = vmatprep.subr.mxu0 %v535
  %1942 = vmatpush1.msra.mxu0 %v534
  %1943 = vmatprep.subr.mxu0 %v531
  %1944 = vmatpush1.msra.mxu0 %v530
  %1945 = vmatprep.subr.mxu0 %v527
  %1946 = vmatpush1.msra.mxu0 %v526
  %1947 = vmatprep.subr.mxu0 %v523
  %1948 = vmatpush1.msra.mxu0 %v522
  %1949 = vmatprep.subr.mxu0 %v519
  %1950 = vmatpush1.msra.mxu0 %v518
  %1951 = vmatprep.subr.mxu0 %v515
  %1952 = vmatpush1.msra.mxu0 %v514
  %1953 = vmatprep.subr.mxu0 0.0
  %1954 = vmatpush2.msra.mxu0 0.0
  %1955 = vmatprep.subr.mxu0 0.0
  %1956 = vmatpush2.msra.mxu0 0.0
  %1957 = vmatprep.subr.mxu0 0.0
  %1958 = vmatpush2.msra.mxu0 0.0
  %1959 = vmatprep.subr.mxu0 0.0
  %1960 = vmatpush2.msra.mxu0 0.0
  %1961 = vmatprep.subr.mxu0 0.0
  %1962 = vmatpush2.msra.mxu0 0.0
  %1963 = vmatprep.subr.mxu0 0.0
  %1964 = vmatpush2.msra.mxu0 0.0
  %1965 = vmatprep.subr.mxu0 0.0
  %1966 = vmatpush2.msra.mxu0 0.0
  %1967 = vmatprep.subr.mxu0 0.0
  %1968 = vmatpush2.msra.mxu0 0.0
  %1969 = vmatprep.subr.mxu0 0.0
  %1970 = vmatpush2.msra.mxu0 0.0
  %1971 = vmatprep.subr.mxu0 0.0
  %1972 = vmatpush2.msra.mxu0 0.0
  %1973 = vmatprep.subr.mxu0 0.0
  %1974 = vmatpush2.msra.mxu0 0.0
  %1975 = vmatprep.subr.mxu0 0.0
  %1976 = vmatpush2.msra.mxu0 0.0
  %1977 = vmatprep.subr.mxu0 0.0
  %1978 = vmatpush2.msra.mxu0 0.0
  %1979 = vmatprep.subr.mxu0 0.0
  %1980 = vmatpush2.msra.mxu0 0.0
  %1981 = vmatprep.subr.mxu0 0.0
  %1982 = vmatpush2.msra.mxu0 0.0
  %1983 = vmatprep.subr.mxu0 0.0
  %1984 = vmatpush2.msra.mxu0 0.0
  %1985 = vmatprep.mubr.f32.mxu0 0.0
  %1986 = vmatmul.mubr.f32.gmra.mxu0 %v1837
  %v1987 = vpop.f32.mrf.mxu0
  %v1988 = vadd.f32 0.0, %v1987
  %v1989 = vpop.f32.mrf.mxu0
  %v1990 = vadd.f32 0.0, %v1989
  %1991 = vdwg.mxu0
  %v1992 = vadd.f32 %v1846, %v1917
  %v1993 = vadd.f32 %v1847, %v1919
  %v1994 = vadd.f32 %v1848, %v1988
  %v1995 = vadd.f32 %v1849, %v1990
  %v1996 = vxor.u32 %v1992, 2147483648
  %v1997 = vmul.f32 %v1996, 1.442695
  %v1998 = vpow.pop %v1997
  %v1999 = vadd.f32 %v1998, 1.0
  %v2000 = vrcp.pop %v1999
  %v2001 = vmul.f32 1.0, %v2000
  %v2002 = vxor.u32 %v1993, 2147483648
  %v2003 = vmul.f32 %v2002, 1.442695
  %v2004 = vpow.pop %v2003
  %v2005 = vadd.f32 %v2004, 1.0
  %v2006 = vrcp.pop %v2005
  %v2007 = vmul.f32 1.0, %v2006
  %v2008 = vtanh.pop %v1994
  %v2009 = vxor.u32 %v1995, 2147483648
  %v2010 = vmul.f32 %v2009, 1.442695
  %v2011 = vpow.pop %v2010
  %v2012 = vadd.f32 %v2011, 1.0
  %v2013 = vrcp.pop %v2012
  %v2014 = vmul.f32 1.0, %v2013
  %v2015 = vmul.f32 %v2007, %v1835
  %v2016 = vmul.f32 %v2001, %v2008
  %v2017 = vadd.f32 %v2015, %v2016
  %v2018 = vtanh.pop %v2017
  %v2019 = vmul.f32 %v2014, %v2018
  %v2020 = vld [vmem:[%s1 + $0x38] sm:$0xff]
  %2022 = vset.pattern.permute.xlu0 0
  %2023 = vperm.xlu0 %2022, %v2020
  %v2024 = vpop.permute.xlu0 %2023
  %v2026 = vmul.f32 %v2019, %v2024
  %v2027 = vadd.f32 %v1845, %v2026
  %v2028 = vld [vmem:[%s7] sm:$0xff]
  %v2029 = vld [vmem:[%s7 + $0x8] sm:$0xff]
  %v2030 = vld [vmem:[%s7 + $0x10] sm:$0xff]
  %v2031 = vld [vmem:[%s7 + $0x18] sm:$0xff]
  %v2032 = vld [vmem:[%s7 + $0x20] sm:$0xff]
  %v2033 = vld [vmem:[%s7 + $0x28] sm:$0xff]
  %v2034 = vld [vmem:[%s7 + $0x30] sm:$0xff]
  %v2035 = vld [vmem:[%s7 + $0x38] sm:$0xff]
  %v2036 = vld [vmem:[%s7 + $0x40] sm:$0xff]
  %v2037 = vld [vmem:[%s7 + $0x48] sm:$0xff]
  %v2038 = vld [vmem:[%s7 + $0x50] sm:$0xff]
  %v2039 = vld [vmem:[%s7 + $0x58] sm:$0xff]
  %v2040 = vld [vmem:[%s7 + $0x60] sm:$0xff]
  %v2041 = vld [vmem:[%s7 + $0x68] sm:$0xff]
  %v2042 = vld [vmem:[%s7 + $0x70] sm:$0xff]
  %v2043 = vld [vmem:[%s7 + $0x78] sm:$0xff]
  %v2044 = vld [vmem:[%s8] sm:$0x1]
  %v2046 = vlaneseq
  %v2047 = vshrl.u32 %v2046, 7
  %v2048 = vsub.s32 0, %v2047
  %v2049 = vrot.slane %v2044, %v2048
  %2051 = vmatprep.subr.mxu0 0.0
  %2052 = vmatpush1.msra.mxu0 %v2043
  %2053 = vmatprep.subr.mxu0 0.0
  %2054 = vmatpush1.msra.mxu0 %v2042
  %2055 = vmatprep.subr.mxu0 0.0
  %2056 = vmatpush1.msra.mxu0 %v2041
  %2057 = vmatprep.subr.mxu0 0.0
  %2058 = vmatpush1.msra.mxu0 %v2040
  %2059 = vmatprep.subr.mxu0 0.0
  %2060 = vmatpush1.msra.mxu0 %v2039
  %2061 = vmatprep.subr.mxu0 0.0
  %2062 = vmatpush1.msra.mxu0 %v2038
  %2063 = vmatprep.subr.mxu0 0.0
  %2064 = vmatpush1.msra.mxu0 %v2037
  %2065 = vmatprep.subr.mxu0 0.0
  %2066 = vmatpush1.msra.mxu0 %v2036
  %2067 = vmatprep.subr.mxu0 0.0
  %2068 = vmatpush1.msra.mxu0 %v2035
  %2069 = vmatprep.subr.mxu0 0.0
  %2070 = vmatpush1.msra.mxu0 %v2034
  %2071 = vmatprep.subr.mxu0 0.0
  %2072 = vmatpush1.msra.mxu0 %v2033
  %2073 = vmatprep.subr.mxu0 0.0
  %2074 = vmatpush1.msra.mxu0 %v2032
  %2075 = vmatprep.subr.mxu0 0.0
  %2076 = vmatpush1.msra.mxu0 %v2031
  %2077 = vmatprep.subr.mxu0 0.0
  %2078 = vmatpush1.msra.mxu0 %v2030
  %2079 = vmatprep.subr.mxu0 0.0
  %2080 = vmatpush1.msra.mxu0 %v2029
  %2081 = vmatprep.subr.mxu0 0.0
  %2082 = vmatpush1.msra.mxu0 %v2028
  %2083 = vmatprep.subr.mxu0 0.0
  %2084 = vmatpush2.msra.mxu0 0.0
  %2085 = vmatprep.subr.mxu0 0.0
  %2086 = vmatpush2.msra.mxu0 0.0
  %2087 = vmatprep.subr.mxu0 0.0
  %2088 = vmatpush2.msra.mxu0 0.0
  %2089 = vmatprep.subr.mxu0 0.0
  %2090 = vmatpush2.msra.mxu0 0.0
  %2091 = vmatprep.subr.mxu0 0.0
  %2092 = vmatpush2.msra.mxu0 0.0
  %2093 = vmatprep.subr.mxu0 0.0
  %2094 = vmatpush2.msra.mxu0 0.0
  %2095 = vmatprep.subr.mxu0 0.0
  %2096 = vmatpush2.msra.mxu0 0.0
  %2097 = vmatprep.subr.mxu0 0.0
  %2098 = vmatpush2.msra.mxu0 0.0
  %2099 = vmatprep.subr.mxu0 0.0
  %2100 = vmatpush2.msra.mxu0 0.0
  %2101 = vmatprep.subr.mxu0 0.0
  %2102 = vmatpush2.msra.mxu0 0.0
  %2103 = vmatprep.subr.mxu0 0.0
  %2104 = vmatpush2.msra.mxu0 0.0
  %2105 = vmatprep.subr.mxu0 0.0
  %2106 = vmatpush2.msra.mxu0 0.0
  %2107 = vmatprep.subr.mxu0 0.0
  %2108 = vmatpush2.msra.mxu0 0.0
  %2109 = vmatprep.subr.mxu0 0.0
  %2110 = vmatpush2.msra.mxu0 0.0
  %2111 = vmatprep.subr.mxu0 0.0
  %2112 = vmatpush2.msra.mxu0 0.0
  %2113 = vmatprep.subr.mxu0 0.0
  %2114 = vmatpush2.msra.mxu0 0.0
  %2115 = vmatprep.mubr.f32.mxu0 0.0
  %2116 = vmatmul.mubr.f32.gmra.mxu0 %v2027
  %v2117 = vpop.f32.mrf.mxu0
  %v2118 = vadd.f32 %v2049, %v2117
  %v2119 = vpop.f32.mrf.mxu0
  %2120 = vdwg.mxu0
  %2121 = vst [vmem:[%s9] sm:$0xff] %v2118
  // Predicated region
  $region38: #{lstm_forward.1} parent=0 // pred_check
    _
  $region39: #{lstm_forward.1} parent=0 // pred_check_branch
    %2123 = sbr.rel (0) target = $region41
  $region40: #{lstm_forward.1} parent=0 // pred_region
    _
  $region41: #{lstm_forward.1} parent=0 // pred_fallthru
    _
  // Predicated region
  $region42: #{lstm_forward.1} parent=0 // pred_check
    _
  $region43: #{lstm_forward.1} parent=0 // pred_check_branch
    %2125 = sbr.rel (0) target = $region45
  $region44: #{lstm_forward.1} parent=0 // pred_region
    _
  $region45: #{lstm_forward.1} parent=0 // pred_fallthru
    _

</llo_original>
